<compile_context>
chip_gen: v6e
topology: v6e:2x2x1
jax: 0.10.0
libtpu: 0.0.40
codegen_flags: <defaults>
</compile_context>

<pallas_src>
import functools
import math

import jax
import jax.numpy as jnp
from jax.experimental import pallas as pl
from jax.experimental.pallas import tpu as pltpu


def _mapping_kernel(x_ref, wth_ref, bh_ref, wto_ref, bo_ref, o_ref, *, slope):
    # x_ref  : (TB, Z)      batch tile of latents (streamed, double-buffered)
    # wth_ref: (NH, Z, Z)   hidden weights, (in, out) layout, scale pre-folded (resident)
    # bh_ref : (NH, Z)      hidden biases, scale pre-folded (resident, f32)
    # wto_ref: (Z, Wd)      final weight, (in, out) layout, scale pre-folded (resident)
    # bo_ref : (1, Wd)      final bias, scale pre-folded (resident, f32)
    # o_ref  : (TB, Wd)
    x = x_ref[...].astype(jnp.float32)

    # noise_normalization
    var = jnp.mean(x * x, axis=1, keepdims=True)
    h = x * jax.lax.rsqrt(var + 1e-8)

    mxu_dtype = wth_ref.dtype          # bf16 by default (native MXU path)
    n_hidden = wth_ref.shape[0]

    for l in range(n_hidden):          # static unroll over 7 hidden z->z layers
        y = jnp.dot(h.astype(mxu_dtype), wth_ref[l],
                    preferred_element_type=jnp.float32)
        y = y + bh_ref[pl.ds(l, 1), :].astype(jnp.float32)   # (1, Z) broadcast
        h = jnp.maximum(y, slope * y)                         # LeakyReLU(0.2)

    # final z -> w layer
    y = jnp.dot(h.astype(mxu_dtype), wto_ref[...],
                preferred_element_type=jnp.float32)
    y = y + bo_ref[...].astype(jnp.float32)
    y = jnp.maximum(y, slope * y)

    o_ref[...] = y.astype(o_ref.dtype)


def _round_up(x, m):
    return ((x + m - 1) // m) * m


def _choose_tile_b(batch, tile_b):
    # Small batches: single full-array block (block dims == array dims, so no
    # (8,128) constraint and no padding copy).
    if batch <= 256 and batch <= tile_b:
        return batch
    # Large batches: MXU-friendly multiple-of-256 tiles (also 128-mult for v5e),
    # capped so the grid has >= 2 steps for v7x megacore sharding.
    cap = max(256, _round_up(tile_b, 256))
    half = max(256, _round_up(pl.cdiv(batch, 2), 256))
    return min(cap, half)


def mapping_network(x, w_hidden, b_hidden, w_out, b_out, *,
                    learning_rate=0.01, bias_scale=0.01,
                    start_size=16, end_size=4096,
                    tile_b=1024, param_dtype=jnp.bfloat16,
                    single_buffer_params=True):
    """Fused MappingNetwork forward.

    x        : (B, Z)
    w_hidden : (NH, Z, Z)   PyTorch (out, in) layout per hidden layer
    b_hidden : (NH, Z)
    w_out    : (Wd, Z)      PyTorch (out, in) layout
    b_out    : (Wd,)
    returns  : (B, style_num, Wd)
    """
    B, Z = x.shape
    NH = w_hidden.shape[0]
    Wd = w_out.shape[0]
    style_num = int(math.log2(end_size / start_size)) * 2 + 2

    # input_dim of every EqualizedLinear (including the last) is z_dimension.
    w_scale = (1.0 / (Z ** 0.5)) * learning_rate
    amp = 2.0 ** 0.5
    slope = 0.2

    # One-time parameter transform (transpose + fold scales + dtype cast):
    #   ((x @ (W*w_scale).T) + b*bias_scale) * amp
    #     == x @ (W.T * (w_scale*amp)) + b * (bias_scale*amp)
    wth = (jnp.transpose(w_hidden, (0, 2, 1)) * (w_scale * amp)).astype(param_dtype)
    bh = (b_hidden * (bias_scale * amp)).astype(jnp.float32)
    wto = (jnp.transpose(w_out, (1, 0)) * (w_scale * amp)).astype(param_dtype)
    bo = (b_out * (bias_scale * amp)).reshape(1, Wd).astype(jnp.float32)

    # Batch tiling.
    tb = _choose_tile_b(B, tile_b)
    b_pad = B if B % tb == 0 else _round_up(B, tb)
    x2d = x if b_pad == B else jnp.pad(x, ((0, b_pad - B), (0, 0)))

    kernel = functools.partial(_mapping_kernel, slope=slope)

    # Grid-invariant params: constant index_map; optionally single-buffered so
    # only one VMEM copy is held across the whole grid.
    pm = dict(pipeline_mode=pl.Buffered(buffer_count=1)) if single_buffer_params else {}
    in_specs = [
        pl.BlockSpec((tb, Z), lambda i: (i, 0)),               # x tile (streamed)
        pl.BlockSpec((NH, Z, Z), lambda i: (0, 0, 0), **pm),   # hidden weights
        pl.BlockSpec((NH, Z), lambda i: (0, 0), **pm),         # hidden biases
        pl.BlockSpec((Z, Wd), lambda i: (0, 0), **pm),         # final weight
        pl.BlockSpec((1, Wd), lambda i: (0, 0), **pm),         # final bias
    ]

    out2d = pl.pallas_call(
        kernel,
        out_shape=jax.ShapeDtypeStruct((b_pad, Wd), x.dtype),
        grid=(b_pad // tb,),
        in_specs=in_specs,
        out_specs=pl.BlockSpec((tb, Wd), lambda i: (i, 0)),
        compiler_params=pltpu.CompilerParams(
            dimension_semantics=("parallel",),
            vmem_limit_bytes=64 * 1024 * 1024),
    )(x2d, wth, bh, wto, bo)

    out2d = out2d[:B]
    # PyTorch's .expand is a broadcast view; do it outside the kernel so the
    # kernel writes B*Wd elements instead of B*style_num*Wd.
    return jnp.broadcast_to(out2d[:, None, :], (B, style_num, Wd))


def mapping_network_ref(x, w_hidden, b_hidden, w_out, b_out, *,
                        learning_rate=0.01, bias_scale=0.01,
                        start_size=16, end_size=4096):
    """Plain-JAX f32 reference matching the PyTorch module."""
    B, Z = x.shape
    Wd = w_out.shape[0]
    style_num = int(math.log2(end_size / start_size)) * 2 + 2
    w_scale = (1.0 / (Z ** 0.5)) * learning_rate
    amp = 2.0 ** 0.5

    var = jnp.mean(x ** 2, axis=1, keepdims=True)
    h = x / jnp.sqrt(var + 1e-8)
    for l in range(w_hidden.shape[0]):
        y = jnp.matmul(h, (w_hidden[l] * w_scale).T,
                       precision=jax.lax.Precision.HIGHEST)
        y = (y + b_hidden[l][None, :] * bias_scale) * amp
        h = jnp.where(y >= 0.0, y, 0.2 * y)
    y = jnp.matmul(h, (w_out * w_scale).T,
                   precision=jax.lax.Precision.HIGHEST)
    y = (y + b_out[None, :] * bias_scale) * amp
    y = jnp.where(y >= 0.0, y, 0.2 * y)
    return jnp.broadcast_to(y[:, None, :], (B, style_num, Wd))


if __name__ == "__main__":
    # Small shapes: batch=2, z_dimension=32, w_dimension=32 (7 hidden z->z
    # layers + 1 z->w layer), start_size=16 / end_size=4096 -> style_num=18.
    B, Z, Wd = 2, 32, 32
    NH = 7

    key = jax.random.PRNGKey(0)
    kx, kwh, kbh, kwo, kbo = jax.random.split(key, 5)

    x = jax.random.normal(kx, (B, Z), dtype=jnp.float32)
    # EqualizedLinear init: weight ~ N(0, (1/lr)^2) with lr=0.01 -> std=100.
    w_hidden = jax.random.normal(kwh, (NH, Z, Z), dtype=jnp.float32) * 100.0
    w_out = jax.random.normal(kwo, (Wd, Z), dtype=jnp.float32) * 100.0
    # Biases are zero-initialized in the module; use small random values so the
    # bias path is exercised by the check.
    b_hidden = jax.random.normal(kbh, (NH, Z), dtype=jnp.float32)
    b_out = jax.random.normal(kbo, (Wd,), dtype=jnp.float32)

    try:
        out = jax.block_until_ready(
            mapping_network(x, w_hidden, b_hidden, w_out, b_out))
    except Exception:
        # Fallback if single-buffered (pl.Buffered(1)) params are unsupported
        # by the local jax/libtpu build.
        out = jax.block_until_ready(
            mapping_network(x, w_hidden, b_hidden, w_out, b_out,
                            single_buffer_params=False))

    ref = mapping_network_ref(x, w_hidden, b_hidden, w_out, b_out)
    style_num = int(math.log2(4096 / 16)) * 2 + 2
    assert out.shape == (B, style_num, Wd), out.shape

    # bf16 weights + default MXU precision vs. the f32 HIGHEST reference:
    # allow a few-percent relative drift (expected numerics, not a bug).
    o32 = out[:, 0, :].astype(jnp.float32)
    r32 = ref[:, 0, :].astype(jnp.float32)
    rel = float(jnp.linalg.norm(o32 - r32) / (jnp.linalg.norm(r32) + 1e-6))
    assert rel < 0.1, f"relative error {rel}"

    print("KERNEL_OK")
</pallas_src>

<mosaic_0001>
module attributes {stable_mosaic.version = 11 : i64} {
  func.func @_mapping_kernel(%arg0: i32, %arg1: memref<2x32xf32, #tpu.memory_space<vmem>>, %arg2: memref<7x32x32xbf16, #tpu.memory_space<vmem>>, %arg3: memref<7x32xf32, #tpu.memory_space<vmem>>, %arg4: memref<32x32xbf16, #tpu.memory_space<vmem>>, %arg5: memref<1x32xf32, #tpu.memory_space<vmem>>, %arg6: memref<2x32xf32, #tpu.memory_space<vmem>>) attributes {dimension_semantics = [#tpu.dimension_semantics<parallel>], iteration_bounds = array<i64: 1>, scalar_prefetch = 0 : i64, scratch_operands = 0 : i64, tpu.core_type = #tpu.core_type<tc>, window_params = [{transform_indices = @transform_0, window_bounds = array<i64: 2, 32>}, {pipeline_mode = #tpu.pipeline_mode<synchronous>, transform_indices = @transform_1, window_bounds = array<i64: 7, 32, 32>}, {pipeline_mode = #tpu.pipeline_mode<synchronous>, transform_indices = @transform_2, window_bounds = array<i64: 7, 32>}, {pipeline_mode = #tpu.pipeline_mode<synchronous>, transform_indices = @transform_3, window_bounds = array<i64: 32, 32>}, {pipeline_mode = #tpu.pipeline_mode<synchronous>, transform_indices = @transform_4, window_bounds = array<i64: 1, 32>}, {transform_indices = @transform_5, window_bounds = array<i64: 2, 32>}]} {
    %c0 = arith.constant 0 : index
    %c0_0 = arith.constant 0 : index
    %0 = vector.load %arg1[%c0, %c0_0] : memref<2x32xf32, #tpu.memory_space<vmem>>, vector<2x32xf32>
    %1 = arith.mulf %0, %0 : vector<2x32xf32>
    %cst = arith.constant dense<0.000000e+00> : vector<2xf32>
    %2 = vector.multi_reduction <add>, %1, %cst [1] : vector<2x32xf32> to vector<2xf32>
    %3 = vector.shape_cast %2 : vector<2xf32> to vector<2x1xf32>
    %cst_1 = arith.constant 3.200000e+01 : f32
    %4 = vector.broadcast %cst_1 : f32 to vector<2x1xf32>
    %5 = arith.divf %3, %4 : vector<2x1xf32>
    %cst_2 = arith.constant 9.99999993E-9 : f32
    %6 = vector.broadcast %cst_2 : f32 to vector<2x1xf32>
    %7 = arith.addf %5, %6 : vector<2x1xf32>
    %8 = math.rsqrt %7 : vector<2x1xf32>
    %9 = vector.broadcast %8 : vector<2x1xf32> to vector<2x32xf32>
    %10 = arith.mulf %0, %9 : vector<2x32xf32>
    %11 = arith.truncf %10 : vector<2x32xf32> to vector<2x32xbf16>
    %c0_3 = arith.constant 0 : index
    %c0_4 = arith.constant 0 : index
    %c0_5 = arith.constant 0 : index
    %12 = vector.load %arg2[%c0_3, %c0_4, %c0_5] : memref<7x32x32xbf16, #tpu.memory_space<vmem>>, vector<1x32x32xbf16>
    %13 = vector.shape_cast %12 : vector<1x32x32xbf16> to vector<32x32xbf16>
    %cst_6 = arith.constant dense<0.000000e+00> : vector<2x32xf32>
    %14 = tpu.matmul %11, %13, %cst_6 {dimension_numbers = #tpu.dot_dimension_numbers<[1], [0], [0], [1], [0, 0, 1, 1], [], []>} : vector<2x32xbf16>, vector<32x32xbf16>, vector<2x32xf32> -> vector<2x32xf32>
    %c0_7 = arith.constant 0 : index
    %c0_8 = arith.constant 0 : index
    %15 = vector.load %arg3[%c0_7, %c0_8] : memref<7x32xf32, #tpu.memory_space<vmem>>, vector<1x32xf32>
    %16 = vector.broadcast %15 : vector<1x32xf32> to vector<2x32xf32>
    %17 = arith.addf %14, %16 : vector<2x32xf32>
    %cst_9 = arith.constant 2.000000e-01 : f32
    %18 = vector.broadcast %cst_9 : f32 to vector<2x32xf32>
    %19 = arith.mulf %18, %17 : vector<2x32xf32>
    %20 = arith.maximumf %17, %19 : vector<2x32xf32>
    %21 = arith.truncf %20 : vector<2x32xf32> to vector<2x32xbf16>
    %c1 = arith.constant 1 : index
    %c0_10 = arith.constant 0 : index
    %c0_11 = arith.constant 0 : index
    %22 = vector.load %arg2[%c1, %c0_10, %c0_11] : memref<7x32x32xbf16, #tpu.memory_space<vmem>>, vector<1x32x32xbf16>
    %23 = vector.shape_cast %22 : vector<1x32x32xbf16> to vector<32x32xbf16>
    %cst_12 = arith.constant dense<0.000000e+00> : vector<2x32xf32>
    %24 = tpu.matmul %21, %23, %cst_12 {dimension_numbers = #tpu.dot_dimension_numbers<[1], [0], [0], [1], [0, 0, 1, 1], [], []>} : vector<2x32xbf16>, vector<32x32xbf16>, vector<2x32xf32> -> vector<2x32xf32>
    %c1_13 = arith.constant 1 : index
    %c0_14 = arith.constant 0 : index
    %25 = vector.load %arg3[%c1_13, %c0_14] : memref<7x32xf32, #tpu.memory_space<vmem>>, vector<1x32xf32>
    %26 = vector.broadcast %25 : vector<1x32xf32> to vector<2x32xf32>
    %27 = arith.addf %24, %26 : vector<2x32xf32>
    %cst_15 = arith.constant 2.000000e-01 : f32
    %28 = vector.broadcast %cst_15 : f32 to vector<2x32xf32>
    %29 = arith.mulf %28, %27 : vector<2x32xf32>
    %30 = arith.maximumf %27, %29 : vector<2x32xf32>
    %31 = arith.truncf %30 : vector<2x32xf32> to vector<2x32xbf16>
    %c2 = arith.constant 2 : index
    %c0_16 = arith.constant 0 : index
    %c0_17 = arith.constant 0 : index
    %32 = vector.load %arg2[%c2, %c0_16, %c0_17] : memref<7x32x32xbf16, #tpu.memory_space<vmem>>, vector<1x32x32xbf16>
    %33 = vector.shape_cast %32 : vector<1x32x32xbf16> to vector<32x32xbf16>
    %cst_18 = arith.constant dense<0.000000e+00> : vector<2x32xf32>
    %34 = tpu.matmul %31, %33, %cst_18 {dimension_numbers = #tpu.dot_dimension_numbers<[1], [0], [0], [1], [0, 0, 1, 1], [], []>} : vector<2x32xbf16>, vector<32x32xbf16>, vector<2x32xf32> -> vector<2x32xf32>
    %c2_19 = arith.constant 2 : index
    %c0_20 = arith.constant 0 : index
    %35 = vector.load %arg3[%c2_19, %c0_20] : memref<7x32xf32, #tpu.memory_space<vmem>>, vector<1x32xf32>
    %36 = vector.broadcast %35 : vector<1x32xf32> to vector<2x32xf32>
    %37 = arith.addf %34, %36 : vector<2x32xf32>
    %cst_21 = arith.constant 2.000000e-01 : f32
    %38 = vector.broadcast %cst_21 : f32 to vector<2x32xf32>
    %39 = arith.mulf %38, %37 : vector<2x32xf32>
    %40 = arith.maximumf %37, %39 : vector<2x32xf32>
    %41 = arith.truncf %40 : vector<2x32xf32> to vector<2x32xbf16>
    %c3 = arith.constant 3 : index
    %c0_22 = arith.constant 0 : index
    %c0_23 = arith.constant 0 : index
    %42 = vector.load %arg2[%c3, %c0_22, %c0_23] : memref<7x32x32xbf16, #tpu.memory_space<vmem>>, vector<1x32x32xbf16>
    %43 = vector.shape_cast %42 : vector<1x32x32xbf16> to vector<32x32xbf16>
    %cst_24 = arith.constant dense<0.000000e+00> : vector<2x32xf32>
    %44 = tpu.matmul %41, %43, %cst_24 {dimension_numbers = #tpu.dot_dimension_numbers<[1], [0], [0], [1], [0, 0, 1, 1], [], []>} : vector<2x32xbf16>, vector<32x32xbf16>, vector<2x32xf32> -> vector<2x32xf32>
    %c3_25 = arith.constant 3 : index
    %c0_26 = arith.constant 0 : index
    %45 = vector.load %arg3[%c3_25, %c0_26] : memref<7x32xf32, #tpu.memory_space<vmem>>, vector<1x32xf32>
    %46 = vector.broadcast %45 : vector<1x32xf32> to vector<2x32xf32>
    %47 = arith.addf %44, %46 : vector<2x32xf32>
    %cst_27 = arith.constant 2.000000e-01 : f32
    %48 = vector.broadcast %cst_27 : f32 to vector<2x32xf32>
    %49 = arith.mulf %48, %47 : vector<2x32xf32>
    %50 = arith.maximumf %47, %49 : vector<2x32xf32>
    %51 = arith.truncf %50 : vector<2x32xf32> to vector<2x32xbf16>
    %c4 = arith.constant 4 : index
    %c0_28 = arith.constant 0 : index
    %c0_29 = arith.constant 0 : index
    %52 = vector.load %arg2[%c4, %c0_28, %c0_29] : memref<7x32x32xbf16, #tpu.memory_space<vmem>>, vector<1x32x32xbf16>
    %53 = vector.shape_cast %52 : vector<1x32x32xbf16> to vector<32x32xbf16>
    %cst_30 = arith.constant dense<0.000000e+00> : vector<2x32xf32>
    %54 = tpu.matmul %51, %53, %cst_30 {dimension_numbers = #tpu.dot_dimension_numbers<[1], [0], [0], [1], [0, 0, 1, 1], [], []>} : vector<2x32xbf16>, vector<32x32xbf16>, vector<2x32xf32> -> vector<2x32xf32>
    %c4_31 = arith.constant 4 : index
    %c0_32 = arith.constant 0 : index
    %55 = vector.load %arg3[%c4_31, %c0_32] : memref<7x32xf32, #tpu.memory_space<vmem>>, vector<1x32xf32>
    %56 = vector.broadcast %55 : vector<1x32xf32> to vector<2x32xf32>
    %57 = arith.addf %54, %56 : vector<2x32xf32>
    %cst_33 = arith.constant 2.000000e-01 : f32
    %58 = vector.broadcast %cst_33 : f32 to vector<2x32xf32>
    %59 = arith.mulf %58, %57 : vector<2x32xf32>
    %60 = arith.maximumf %57, %59 : vector<2x32xf32>
    %61 = arith.truncf %60 : vector<2x32xf32> to vector<2x32xbf16>
    %c5 = arith.constant 5 : index
    %c0_34 = arith.constant 0 : index
    %c0_35 = arith.constant 0 : index
    %62 = vector.load %arg2[%c5, %c0_34, %c0_35] : memref<7x32x32xbf16, #tpu.memory_space<vmem>>, vector<1x32x32xbf16>
    %63 = vector.shape_cast %62 : vector<1x32x32xbf16> to vector<32x32xbf16>
    %cst_36 = arith.constant dense<0.000000e+00> : vector<2x32xf32>
    %64 = tpu.matmul %61, %63, %cst_36 {dimension_numbers = #tpu.dot_dimension_numbers<[1], [0], [0], [1], [0, 0, 1, 1], [], []>} : vector<2x32xbf16>, vector<32x32xbf16>, vector<2x32xf32> -> vector<2x32xf32>
    %c5_37 = arith.constant 5 : index
    %c0_38 = arith.constant 0 : index
    %65 = vector.load %arg3[%c5_37, %c0_38] : memref<7x32xf32, #tpu.memory_space<vmem>>, vector<1x32xf32>
    %66 = vector.broadcast %65 : vector<1x32xf32> to vector<2x32xf32>
    %67 = arith.addf %64, %66 : vector<2x32xf32>
    %cst_39 = arith.constant 2.000000e-01 : f32
    %68 = vector.broadcast %cst_39 : f32 to vector<2x32xf32>
    %69 = arith.mulf %68, %67 : vector<2x32xf32>
    %70 = arith.maximumf %67, %69 : vector<2x32xf32>
    %71 = arith.truncf %70 : vector<2x32xf32> to vector<2x32xbf16>
    %c6 = arith.constant 6 : index
    %c0_40 = arith.constant 0 : index
    %c0_41 = arith.constant 0 : index
    %72 = vector.load %arg2[%c6, %c0_40, %c0_41] : memref<7x32x32xbf16, #tpu.memory_space<vmem>>, vector<1x32x32xbf16>
    %73 = vector.shape_cast %72 : vector<1x32x32xbf16> to vector<32x32xbf16>
    %cst_42 = arith.constant dense<0.000000e+00> : vector<2x32xf32>
    %74 = tpu.matmul %71, %73, %cst_42 {dimension_numbers = #tpu.dot_dimension_numbers<[1], [0], [0], [1], [0, 0, 1, 1], [], []>} : vector<2x32xbf16>, vector<32x32xbf16>, vector<2x32xf32> -> vector<2x32xf32>
    %c6_43 = arith.constant 6 : index
    %c0_44 = arith.constant 0 : index
    %75 = vector.load %arg3[%c6_43, %c0_44] : memref<7x32xf32, #tpu.memory_space<vmem>>, vector<1x32xf32>
    %76 = vector.broadcast %75 : vector<1x32xf32> to vector<2x32xf32>
    %77 = arith.addf %74, %76 : vector<2x32xf32>
    %cst_45 = arith.constant 2.000000e-01 : f32
    %78 = vector.broadcast %cst_45 : f32 to vector<2x32xf32>
    %79 = arith.mulf %78, %77 : vector<2x32xf32>
    %80 = arith.maximumf %77, %79 : vector<2x32xf32>
    %81 = arith.truncf %80 : vector<2x32xf32> to vector<2x32xbf16>
    %c0_46 = arith.constant 0 : index
    %c0_47 = arith.constant 0 : index
    %82 = vector.load %arg4[%c0_46, %c0_47] : memref<32x32xbf16, #tpu.memory_space<vmem>>, vector<32x32xbf16>
    %cst_48 = arith.constant dense<0.000000e+00> : vector<2x32xf32>
    %83 = tpu.matmul %81, %82, %cst_48 {dimension_numbers = #tpu.dot_dimension_numbers<[1], [0], [0], [1], [0, 0, 1, 1], [], []>} : vector<2x32xbf16>, vector<32x32xbf16>, vector<2x32xf32> -> vector<2x32xf32>
    %c0_49 = arith.constant 0 : index
    %c0_50 = arith.constant 0 : index
    %84 = vector.load %arg5[%c0_49, %c0_50] : memref<1x32xf32, #tpu.memory_space<vmem>>, vector<1x32xf32>
    %85 = vector.broadcast %84 : vector<1x32xf32> to vector<2x32xf32>
    %86 = arith.addf %83, %85 : vector<2x32xf32>
    %cst_51 = arith.constant 2.000000e-01 : f32
    %87 = vector.broadcast %cst_51 : f32 to vector<2x32xf32>
    %88 = arith.mulf %87, %86 : vector<2x32xf32>
    %89 = arith.maximumf %86, %88 : vector<2x32xf32>
    %c0_52 = arith.constant 0 : index
    %c0_53 = arith.constant 0 : index
    %90 = vector.load %arg6[%c0_52, %c0_53] : memref<2x32xf32, #tpu.memory_space<vmem>>, vector<2x32xf32>
    tpu.vector_store %arg6[%c0_52, %c0_53], %89 {strides = array<i32>} : memref<2x32xf32, #tpu.memory_space<vmem>>, vector<2x32xf32>,
    return
  }
  func.func @transform_0(%arg0: i32) -> (i32, i32) {
    %c0_i32 = arith.constant 0 : i32
    %c0_i32_0 = arith.constant 0 : i32
    return %arg0, %c0_i32 : i32, i32
  }
  func.func @transform_1(%arg0: i32) -> (i32, i32, i32) {
    %c0_i32 = arith.constant 0 : i32
    %c0_i32_0 = arith.constant 0 : i32
    %c0_i32_1 = arith.constant 0 : i32
    %c0_i32_2 = arith.constant 0 : i32
    return %c0_i32, %c0_i32_0, %c0_i32_1 : i32, i32, i32
  }
  func.func @transform_2(%arg0: i32) -> (i32, i32) {
    %c0_i32 = arith.constant 0 : i32
    %c0_i32_0 = arith.constant 0 : i32
    %c0_i32_1 = arith.constant 0 : i32
    return %c0_i32, %c0_i32_0 : i32, i32
  }
  func.func @transform_3(%arg0: i32) -> (i32, i32) {
    %c0_i32 = arith.constant 0 : i32
    %c0_i32_0 = arith.constant 0 : i32
    %c0_i32_1 = arith.constant 0 : i32
    return %c0_i32, %c0_i32_0 : i32, i32
  }
  func.func @transform_4(%arg0: i32) -> (i32, i32) {
    %c0_i32 = arith.constant 0 : i32
    %c0_i32_0 = arith.constant 0 : i32
    %c0_i32_1 = arith.constant 0 : i32
    return %c0_i32, %c0_i32_0 : i32, i32
  }
  func.func @transform_5(%arg0: i32) -> (i32, i32) {
    %c0_i32 = arith.constant 0 : i32
    %c0_i32_0 = arith.constant 0 : i32
    return %arg0, %c0_i32 : i32, i32
  }
}

module attributes {stable_mosaic.version = 11 : i64} {
  func.func @_mapping_kernel(%arg0: i32, %arg1: memref<2x32xf32, #tpu.memory_space<vmem>>, %arg2: memref<7x32x32xbf16, #tpu.memory_space<vmem>>, %arg3: memref<7x32xf32, #tpu.memory_space<vmem>>, %arg4: memref<32x32xbf16, #tpu.memory_space<vmem>>, %arg5: memref<1x32xf32, #tpu.memory_space<vmem>>, %arg6: memref<2x32xf32, #tpu.memory_space<vmem>>) attributes {dimension_semantics = [#tpu.dimension_semantics<parallel>], iteration_bounds = array<i64: 1>, scalar_prefetch = 0 : i64, scratch_operands = 0 : i64, tpu.core_type = #tpu.core_type<tc>, window_params = [{transform_indices = @transform_0, window_bounds = array<i64: 2, 32>}, {pipeline_mode = #tpu.pipeline_mode<synchronous>, transform_indices = @transform_1, window_bounds = array<i64: 7, 32, 32>}, {pipeline_mode = #tpu.pipeline_mode<synchronous>, transform_indices = @transform_2, window_bounds = array<i64: 7, 32>}, {pipeline_mode = #tpu.pipeline_mode<synchronous>, transform_indices = @transform_3, window_bounds = array<i64: 32, 32>}, {pipeline_mode = #tpu.pipeline_mode<synchronous>, transform_indices = @transform_4, window_bounds = array<i64: 1, 32>}, {transform_indices = @transform_5, window_bounds = array<i64: 2, 32>}]} {
    %c0 = arith.constant 0 : index
    %c0_0 = arith.constant 0 : index
    %0 = vector.load %arg1[%c0, %c0_0] : memref<2x32xf32, #tpu.memory_space<vmem>>, vector<2x32xf32>
    %1 = arith.mulf %0, %0 : vector<2x32xf32>
    %cst = arith.constant dense<0.000000e+00> : vector<2xf32>
    %2 = vector.multi_reduction <add>, %1, %cst [1] : vector<2x32xf32> to vector<2xf32>
    %3 = vector.shape_cast %2 : vector<2xf32> to vector<2x1xf32>
    %cst_1 = arith.constant 3.200000e+01 : f32
    %4 = vector.broadcast %cst_1 : f32 to vector<2x1xf32>
    %5 = arith.divf %3, %4 : vector<2x1xf32>
    %cst_2 = arith.constant 9.99999993E-9 : f32
    %6 = vector.broadcast %cst_2 : f32 to vector<2x1xf32>
    %7 = arith.addf %5, %6 : vector<2x1xf32>
    %8 = math.rsqrt %7 : vector<2x1xf32>
    %9 = vector.broadcast %8 : vector<2x1xf32> to vector<2x32xf32>
    %10 = arith.mulf %0, %9 : vector<2x32xf32>
    %11 = arith.truncf %10 : vector<2x32xf32> to vector<2x32xbf16>
    %c0_3 = arith.constant 0 : index
    %c0_4 = arith.constant 0 : index
    %c0_5 = arith.constant 0 : index
    %12 = vector.load %arg2[%c0_3, %c0_4, %c0_5] : memref<7x32x32xbf16, #tpu.memory_space<vmem>>, vector<1x32x32xbf16>
    %13 = vector.shape_cast %12 : vector<1x32x32xbf16> to vector<32x32xbf16>
    %cst_6 = arith.constant dense<0.000000e+00> : vector<2x32xf32>
    %14 = tpu.matmul %11, %13, %cst_6 {dimension_numbers = #tpu.dot_dimension_numbers<[1], [0], [0], [1], [0, 0, 1, 1], [], []>} : vector<2x32xbf16>, vector<32x32xbf16>, vector<2x32xf32> -> vector<2x32xf32>
    %c0_7 = arith.constant 0 : index
    %c0_8 = arith.constant 0 : index
    %15 = vector.load %arg3[%c0_7, %c0_8] : memref<7x32xf32, #tpu.memory_space<vmem>>, vector<1x32xf32>
    %16 = vector.broadcast %15 : vector<1x32xf32> to vector<2x32xf32>
    %17 = arith.addf %14, %16 : vector<2x32xf32>
    %cst_9 = arith.constant 2.000000e-01 : f32
    %18 = vector.broadcast %cst_9 : f32 to vector<2x32xf32>
    %19 = arith.mulf %18, %17 : vector<2x32xf32>
    %20 = arith.maximumf %17, %19 : vector<2x32xf32>
    %21 = arith.truncf %20 : vector<2x32xf32> to vector<2x32xbf16>
    %c1 = arith.constant 1 : index
    %c0_10 = arith.constant 0 : index
    %c0_11 = arith.constant 0 : index
    %22 = vector.load %arg2[%c1, %c0_10, %c0_11] : memref<7x32x32xbf16, #tpu.memory_space<vmem>>, vector<1x32x32xbf16>
    %23 = vector.shape_cast %22 : vector<1x32x32xbf16> to vector<32x32xbf16>
    %cst_12 = arith.constant dense<0.000000e+00> : vector<2x32xf32>
    %24 = tpu.matmul %21, %23, %cst_12 {dimension_numbers = #tpu.dot_dimension_numbers<[1], [0], [0], [1], [0, 0, 1, 1], [], []>} : vector<2x32xbf16>, vector<32x32xbf16>, vector<2x32xf32> -> vector<2x32xf32>
    %c1_13 = arith.constant 1 : index
    %c0_14 = arith.constant 0 : index
    %25 = vector.load %arg3[%c1_13, %c0_14] : memref<7x32xf32, #tpu.memory_space<vmem>>, vector<1x32xf32>
    %26 = vector.broadcast %25 : vector<1x32xf32> to vector<2x32xf32>
    %27 = arith.addf %24, %26 : vector<2x32xf32>
    %cst_15 = arith.constant 2.000000e-01 : f32
    %28 = vector.broadcast %cst_15 : f32 to vector<2x32xf32>
    %29 = arith.mulf %28, %27 : vector<2x32xf32>
    %30 = arith.maximumf %27, %29 : vector<2x32xf32>
    %31 = arith.truncf %30 : vector<2x32xf32> to vector<2x32xbf16>
    %c2 = arith.constant 2 : index
    %c0_16 = arith.constant 0 : index
    %c0_17 = arith.constant 0 : index
    %32 = vector.load %arg2[%c2, %c0_16, %c0_17] : memref<7x32x32xbf16, #tpu.memory_space<vmem>>, vector<1x32x32xbf16>
    %33 = vector.shape_cast %32 : vector<1x32x32xbf16> to vector<32x32xbf16>
    %cst_18 = arith.constant dense<0.000000e+00> : vector<2x32xf32>
    %34 = tpu.matmul %31, %33, %cst_18 {dimension_numbers = #tpu.dot_dimension_numbers<[1], [0], [0], [1], [0, 0, 1, 1], [], []>} : vector<2x32xbf16>, vector<32x32xbf16>, vector<2x32xf32> -> vector<2x32xf32>
    %c2_19 = arith.constant 2 : index
    %c0_20 = arith.constant 0 : index
    %35 = vector.load %arg3[%c2_19, %c0_20] : memref<7x32xf32, #tpu.memory_space<vmem>>, vector<1x32xf32>
    %36 = vector.broadcast %35 : vector<1x32xf32> to vector<2x32xf32>
    %37 = arith.addf %34, %36 : vector<2x32xf32>
    %cst_21 = arith.constant 2.000000e-01 : f32
    %38 = vector.broadcast %cst_21 : f32 to vector<2x32xf32>
    %39 = arith.mulf %38, %37 : vector<2x32xf32>
    %40 = arith.maximumf %37, %39 : vector<2x32xf32>
    %41 = arith.truncf %40 : vector<2x32xf32> to vector<2x32xbf16>
    %c3 = arith.constant 3 : index
    %c0_22 = arith.constant 0 : index
    %c0_23 = arith.constant 0 : index
    %42 = vector.load %arg2[%c3, %c0_22, %c0_23] : memref<7x32x32xbf16, #tpu.memory_space<vmem>>, vector<1x32x32xbf16>
    %43 = vector.shape_cast %42 : vector<1x32x32xbf16> to vector<32x32xbf16>
    %cst_24 = arith.constant dense<0.000000e+00> : vector<2x32xf32>
    %44 = tpu.matmul %41, %43, %cst_24 {dimension_numbers = #tpu.dot_dimension_numbers<[1], [0], [0], [1], [0, 0, 1, 1], [], []>} : vector<2x32xbf16>, vector<32x32xbf16>, vector<2x32xf32> -> vector<2x32xf32>
    %c3_25 = arith.constant 3 : index
    %c0_26 = arith.constant 0 : index
    %45 = vector.load %arg3[%c3_25, %c0_26] : memref<7x32xf32, #tpu.memory_space<vmem>>, vector<1x32xf32>
    %46 = vector.broadcast %45 : vector<1x32xf32> to vector<2x32xf32>
    %47 = arith.addf %44, %46 : vector<2x32xf32>
    %cst_27 = arith.constant 2.000000e-01 : f32
    %48 = vector.broadcast %cst_27 : f32 to vector<2x32xf32>
    %49 = arith.mulf %48, %47 : vector<2x32xf32>
    %50 = arith.maximumf %47, %49 : vector<2x32xf32>
    %51 = arith.truncf %50 : vector<2x32xf32> to vector<2x32xbf16>
    %c4 = arith.constant 4 : index
    %c0_28 = arith.constant 0 : index
    %c0_29 = arith.constant 0 : index
    %52 = vector.load %arg2[%c4, %c0_28, %c0_29] : memref<7x32x32xbf16, #tpu.memory_space<vmem>>, vector<1x32x32xbf16>
    %53 = vector.shape_cast %52 : vector<1x32x32xbf16> to vector<32x32xbf16>
    %cst_30 = arith.constant dense<0.000000e+00> : vector<2x32xf32>
    %54 = tpu.matmul %51, %53, %cst_30 {dimension_numbers = #tpu.dot_dimension_numbers<[1], [0], [0], [1], [0, 0, 1, 1], [], []>} : vector<2x32xbf16>, vector<32x32xbf16>, vector<2x32xf32> -> vector<2x32xf32>
    %c4_31 = arith.constant 4 : index
    %c0_32 = arith.constant 0 : index
    %55 = vector.load %arg3[%c4_31, %c0_32] : memref<7x32xf32, #tpu.memory_space<vmem>>, vector<1x32xf32>
    %56 = vector.broadcast %55 : vector<1x32xf32> to vector<2x32xf32>
    %57 = arith.addf %54, %56 : vector<2x32xf32>
    %cst_33 = arith.constant 2.000000e-01 : f32
    %58 = vector.broadcast %cst_33 : f32 to vector<2x32xf32>
    %59 = arith.mulf %58, %57 : vector<2x32xf32>
    %60 = arith.maximumf %57, %59 : vector<2x32xf32>
    %61 = arith.truncf %60 : vector<2x32xf32> to vector<2x32xbf16>
    %c5 = arith.constant 5 : index
    %c0_34 = arith.constant 0 : index
    %c0_35 = arith.constant 0 : index
    %62 = vector.load %arg2[%c5, %c0_34, %c0_35] : memref<7x32x32xbf16, #tpu.memory_space<vmem>>, vector<1x32x32xbf16>
    %63 = vector.shape_cast %62 : vector<1x32x32xbf16> to vector<32x32xbf16>
    %cst_36 = arith.constant dense<0.000000e+00> : vector<2x32xf32>
    %64 = tpu.matmul %61, %63, %cst_36 {dimension_numbers = #tpu.dot_dimension_numbers<[1], [0], [0], [1], [0, 0, 1, 1], [], []>} : vector<2x32xbf16>, vector<32x32xbf16>, vector<2x32xf32> -> vector<2x32xf32>
    %c5_37 = arith.constant 5 : index
    %c0_38 = arith.constant 0 : index
    %65 = vector.load %arg3[%c5_37, %c0_38] : memref<7x32xf32, #tpu.memory_space<vmem>>, vector<1x32xf32>
    %66 = vector.broadcast %65 : vector<1x32xf32> to vector<2x32xf32>
    %67 = arith.addf %64, %66 : vector<2x32xf32>
    %cst_39 = arith.constant 2.000000e-01 : f32
    %68 = vector.broadcast %cst_39 : f32 to vector<2x32xf32>
    %69 = arith.mulf %68, %67 : vector<2x32xf32>
    %70 = arith.maximumf %67, %69 : vector<2x32xf32>
    %71 = arith.truncf %70 : vector<2x32xf32> to vector<2x32xbf16>
    %c6 = arith.constant 6 : index
    %c0_40 = arith.constant 0 : index
    %c0_41 = arith.constant 0 : index
    %72 = vector.load %arg2[%c6, %c0_40, %c0_41] : memref<7x32x32xbf16, #tpu.memory_space<vmem>>, vector<1x32x32xbf16>
    %73 = vector.shape_cast %72 : vector<1x32x32xbf16> to vector<32x32xbf16>
    %cst_42 = arith.constant dense<0.000000e+00> : vector<2x32xf32>
    %74 = tpu.matmul %71, %73, %cst_42 {dimension_numbers = #tpu.dot_dimension_numbers<[1], [0], [0], [1], [0, 0, 1, 1], [], []>} : vector<2x32xbf16>, vector<32x32xbf16>, vector<2x32xf32> -> vector<2x32xf32>
    %c6_43 = arith.constant 6 : index
    %c0_44 = arith.constant 0 : index
    %75 = vector.load %arg3[%c6_43, %c0_44] : memref<7x32xf32, #tpu.memory_space<vmem>>, vector<1x32xf32>
    %76 = vector.broadcast %75 : vector<1x32xf32> to vector<2x32xf32>
    %77 = arith.addf %74, %76 : vector<2x32xf32>
    %cst_45 = arith.constant 2.000000e-01 : f32
    %78 = vector.broadcast %cst_45 : f32 to vector<2x32xf32>
    %79 = arith.mulf %78, %77 : vector<2x32xf32>
    %80 = arith.maximumf %77, %79 : vector<2x32xf32>
    %81 = arith.truncf %80 : vector<2x32xf32> to vector<2x32xbf16>
    %c0_46 = arith.constant 0 : index
    %c0_47 = arith.constant 0 : index
    %82 = vector.load %arg4[%c0_46, %c0_47] : memref<32x32xbf16, #tpu.memory_space<vmem>>, vector<32x32xbf16>
    %cst_48 = arith.constant dense<0.000000e+00> : vector<2x32xf32>
    %83 = tpu.matmul %81, %82, %cst_48 {dimension_numbers = #tpu.dot_dimension_numbers<[1], [0], [0], [1], [0, 0, 1, 1], [], []>} : vector<2x32xbf16>, vector<32x32xbf16>, vector<2x32xf32> -> vector<2x32xf32>
    %c0_49 = arith.constant 0 : index
    %c0_50 = arith.constant 0 : index
    %84 = vector.load %arg5[%c0_49, %c0_50] : memref<1x32xf32, #tpu.memory_space<vmem>>, vector<1x32xf32>
    %85 = vector.broadcast %84 : vector<1x32xf32> to vector<2x32xf32>
    %86 = arith.addf %83, %85 : vector<2x32xf32>
    %cst_51 = arith.constant 2.000000e-01 : f32
    %87 = vector.broadcast %cst_51 : f32 to vector<2x32xf32>
    %88 = arith.mulf %87, %86 : vector<2x32xf32>
    %89 = arith.maximumf %86, %88 : vector<2x32xf32>
    %c0_52 = arith.constant 0 : index
    %c0_53 = arith.constant 0 : index
    %90 = vector.load %arg6[%c0_52, %c0_53] : memref<2x32xf32, #tpu.memory_space<vmem>>, vector<2x32xf32>
    tpu.vector_store %arg6[%c0_52, %c0_53], %89 {strides = array<i32>} : memref<2x32xf32, #tpu.memory_space<vmem>>, vector<2x32xf32>,
    return
  }
  func.func @transform_0(%arg0: i32) -> (i32, i32) {
    %c0_i32 = arith.constant 0 : i32
    %c0_i32_0 = arith.constant 0 : i32
    return %arg0, %c0_i32 : i32, i32
  }
  func.func @transform_1(%arg0: i32) -> (i32, i32, i32) {
    %c0_i32 = arith.constant 0 : i32
    %c0_i32_0 = arith.constant 0 : i32
    %c0_i32_1 = arith.constant 0 : i32
    %c0_i32_2 = arith.constant 0 : i32
    return %c0_i32, %c0_i32_0, %c0_i32_1 : i32, i32, i32
  }
  func.func @transform_2(%arg0: i32) -> (i32, i32) {
    %c0_i32 = arith.constant 0 : i32
    %c0_i32_0 = arith.constant 0 : i32
    %c0_i32_1 = arith.constant 0 : i32
    return %c0_i32, %c0_i32_0 : i32, i32
  }
  func.func @transform_3(%arg0: i32) -> (i32, i32) {
    %c0_i32 = arith.constant 0 : i32
    %c0_i32_0 = arith.constant 0 : i32
    %c0_i32_1 = arith.constant 0 : i32
    return %c0_i32, %c0_i32_0 : i32, i32
  }
  func.func @transform_4(%arg0: i32) -> (i32, i32) {
    %c0_i32 = arith.constant 0 : i32
    %c0_i32_0 = arith.constant 0 : i32
    %c0_i32_1 = arith.constant 0 : i32
    return %c0_i32, %c0_i32_0 : i32, i32
  }
  func.func @transform_5(%arg0: i32) -> (i32, i32) {
    %c0_i32 = arith.constant 0 : i32
    %c0_i32_0 = arith.constant 0 : i32
    return %arg0, %c0_i32 : i32, i32
  }
}

</mosaic_0001>

<llo_original>
// kernel: tpu_custom_call.1
$region0: #{tpu_custom_call.1}
  #allocation0 [shape = 'u32[]', space=smem, size = 0x4, offset = 0x4, fixed_abs, tag = 'smem constant byte address 0x4 - core index']
  #allocation1 [shape = 'u32[144,128]{1,0:T(1,128)}', space=vmem, size = 0x12000, scoped, tag = 'internal scratch']
  %s0 = inlined_call_operand.hbm [shape: f32[2,32], index: 0, kind: input, shape index: {}]
  %s1 = inlined_call_operand.hbm [shape: bf16[7,32,32], index: 1, kind: input, shape index: {}]
  %s2 = inlined_call_operand.hbm [shape: f32[7,32], index: 2, kind: input, shape index: {}]
  %s3 = inlined_call_operand.hbm [shape: bf16[32,32], index: 3, kind: input, shape index: {}]
  %s4 = inlined_call_operand.vmem [shape: f32[1,32], index: 4, kind: input, shape index: {}]
  %s5 = inlined_call_operand.hbm [shape: f32[2,32], index: 5, kind: output, shape index: {}]
  %s6 = sld [smem:[#allocation0]]
  $region46: #{tpu_custom_call.1} parent=0
    _
  %s8 = ssub.s32 1, %s6
  %s9 = scalar_select 0, %s8, %s6
  $region1: #{tpu_custom_call.1} parent=0
    #allocation2 [shape = 'u8[1024]{0}', space=vmem, size = 0x400, scoped, tag = 'input window, operand 0, single buffered']
    #allocation3 [shape = 's32[1]{0}', space=sflag, size = 0x4, scoped, tag = 'scoped memory for tpu_custom_call.1']
    #allocation4 [shape = 's32[1]{0}', space=sflag, size = 0x4, scoped, tag = 'scoped memory for tpu_custom_call.1']
    #allocation5 [shape = 'u8[57344]{0}', space=vmem, size = 0xe000, scoped, tag = 'input window, operand 1, single buffered']
    #allocation6 [shape = 's32[1]{0}', space=sflag, size = 0x4, scoped, tag = 'scoped memory for tpu_custom_call.1']
    #allocation7 [shape = 'u8[4096]{0}', space=vmem, size = 0x1000, scoped, tag = 'input window, operand 2, single buffered']
    #allocation8 [shape = 'u8[8192]{0}', space=vmem, size = 0x2000, scoped, tag = 'input window, operand 3, single buffered']
    #allocation9 [shape = 's32[1]{0}', space=sflag, size = 0x4, scoped, tag = 'scoped memory for tpu_custom_call.1']
    #allocation10 [shape = 'u8[1024]{0}', space=vmem, size = 0x400, scoped, tag = 'output window, operand 0, single buffered']
    %10 = vsyncpa [#allocation3], 0
    %11 = vsyncpa [#allocation6], 0
    %12 = vsyncpa [#allocation9], 0
    %13 = vsyncpa [#allocation4], 0
    // Predicated region
    $region2: #{tpu_custom_call.1} parent=1 // pred_check
      _
    $region3: #{tpu_custom_call.1} parent=1 // pred_check_branch
      %15 = sbr.rel (0) target = $region5
    $region4: #{tpu_custom_call.1} parent=1 // pred_region
      %s17 = ssub.s32 32, 32
      %18 = vsyncadd [#allocation3], %s17
      %s20 = sshll.u32 [#allocation2], 4
      %s21 = int_to_ptr.vmem [resolvable:$true] %s20
      %23 = dma.hbm_to_vmem [thread:$0]  %s0, 32, %s21, [#allocation3]
    $region5: #{tpu_custom_call.1} parent=1 // pred_fallthru
      _
    // Predicated region
    $region6: #{tpu_custom_call.1} parent=1 // pred_check
      _
    $region7: #{tpu_custom_call.1} parent=1 // pred_check_branch
      %25 = sbr.rel (0) target = $region9
    $region8: #{tpu_custom_call.1} parent=1 // pred_region
      %s27 = ssub.s32 1792, 1792
      %28 = vsyncadd [#allocation6], %s27
      %s29 = sshll.u32 [#allocation5], 4
      %s30 = int_to_ptr.vmem [resolvable:$true] %s29
      %35 = dma.hbm_to_vmem [thread:$0]  %s1, 1792, %s30, [#allocation6], 64, 64, 4
    $region9: #{tpu_custom_call.1} parent=1 // pred_fallthru
      _
    // Predicated region
    $region10: #{tpu_custom_call.1} parent=1 // pred_check
      _
    $region11: #{tpu_custom_call.1} parent=1 // pred_check_branch
      %37 = sbr.rel (0) target = $region13
    $region12: #{tpu_custom_call.1} parent=1 // pred_region
      %s39 = ssub.s32 128, 128
      %40 = vsyncadd [#allocation6], %s39
      %s42 = sshll.u32 [#allocation7], 4
      %s43 = int_to_ptr.vmem [resolvable:$true] %s42
      %45 = dma.hbm_to_vmem [thread:$0]  %s2, 128, %s43, [#allocation6]
    $region13: #{tpu_custom_call.1} parent=1 // pred_fallthru
      _
    // Predicated region
    $region14: #{tpu_custom_call.1} parent=1 // pred_check
      _
    $region15: #{tpu_custom_call.1} parent=1 // pred_check_branch
      %47 = sbr.rel (0) target = $region17
    $region16: #{tpu_custom_call.1} parent=1 // pred_region
      %s49 = ssub.s32 256, 256
      %50 = vsyncadd [#allocation9], %s49
      %s51 = sshll.u32 [#allocation8], 4
      %s52 = int_to_ptr.vmem [resolvable:$true] %s51
      %57 = dma.hbm_to_vmem [thread:$0]  %s3, 256, %s52, [#allocation9], 64, 64, 4
    $region17: #{tpu_custom_call.1} parent=1 // pred_fallthru
      _
    // Predicated region
    $region18: #{tpu_custom_call.1} parent=1 // pred_check
      _
    $region19: #{tpu_custom_call.1} parent=1 // pred_check_branch
      %59 = sbr.rel (0) target = $region21
    $region20: #{tpu_custom_call.1} parent=1 // pred_region
      _
    $region21: #{tpu_custom_call.1} parent=1 // pred_fallthru
      _
    // Predicated region
    $region22: #{tpu_custom_call.1} parent=1 // pred_check
      _
    $region23: #{tpu_custom_call.1} parent=1 // pred_check_branch
      %61 = sbr.rel (0) target = $region25
    $region24: #{tpu_custom_call.1} parent=1 // pred_region
      %62 = dma.done [#allocation3], 32
    $region25: #{tpu_custom_call.1} parent=1 // pred_fallthru
      _
    // Predicated region
    $region26: #{tpu_custom_call.1} parent=1 // pred_check
      _
    $region27: #{tpu_custom_call.1} parent=1 // pred_check_branch
      %64 = sbr.rel (0) target = $region29
    $region28: #{tpu_custom_call.1} parent=1 // pred_region
      %65 = dma.done [#allocation6], 1792
    $region29: #{tpu_custom_call.1} parent=1 // pred_fallthru
      _
    // Predicated region
    $region30: #{tpu_custom_call.1} parent=1 // pred_check
      _
    $region31: #{tpu_custom_call.1} parent=1 // pred_check_branch
      %67 = sbr.rel (0) target = $region33
    $region32: #{tpu_custom_call.1} parent=1 // pred_region
      %68 = dma.done [#allocation6], 128
    $region33: #{tpu_custom_call.1} parent=1 // pred_fallthru
      _
    // Predicated region
    $region34: #{tpu_custom_call.1} parent=1 // pred_check
      _
    $region35: #{tpu_custom_call.1} parent=1 // pred_check_branch
      %70 = sbr.rel (0) target = $region37
    $region36: #{tpu_custom_call.1} parent=1 // pred_region
      %71 = dma.done [#allocation9], 256
    $region37: #{tpu_custom_call.1} parent=1 // pred_fallthru
      _
    %v73 = vld [vmem:[#allocation2] sm:$0x3]
    %v74 = vmul.f32 %v73, %v73
    %vm75 = vcmask 254976
    %v76 = vsel %vm75, %v74, 0.0
    %77 = vadd.xlane.f32.xlu0 %v76
    %v78 = vpop.xlane.xlu0 %77
    %v79 = vrcp.pop 32.0
    %v80 = vmul.f32 %v78, %v79
    %v81 = vadd.f32 %v80, 1e-08
    %v82 = vrsqrt.pop %v81
    %v83 = vmul.f32 %v73, %v82
    %v84 = vpack.c.bf16 %v83, %v83
    %v85 = vld [vmem:[#allocation5] sm:$0xf]
    %v86 = vld [vmem:[#allocation5 + $0x4] sm:$0xf]
    %v87 = vld [vmem:[#allocation5 + $0x8] sm:$0xf]
    %v88 = vld [vmem:[#allocation5 + $0xc] sm:$0xf]
    %v89 = vld [vmem:[#allocation7] sm:$0x1]
    %v90 = vlaneseq
    %v91 = vshrl.u32 %v90, 7
    %v92 = vsub.s32 0, %v91
    %v93 = vrot.slane %v89, %v92
    %v98 = vunpack.c.l.b16 %v85
    %v99 = vunpack.c.l.b16 %v86
    %v100 = vunpack.c.l.b16 %v87
    %v101 = vunpack.c.l.b16 %v88
    %v102 = vpack.c.b16 %v99, %v98
    %v103 = vpack.c.b16 %v101, %v100
    %vm106 = vcmask 261120
    %v108 = vsel %vm106, %v84, 0
    %110 = vmatprep.subr.bf16.mxu0 0
    %111 = vmatpush1.bf16.msra.mxu0 0
    %112 = vmatprep.subr.bf16.mxu0 0
    %113 = vmatpush1.bf16.msra.mxu0 0
    %114 = vmatprep.subr.bf16.mxu0 0
    %115 = vmatpush1.bf16.msra.mxu0 0
    %116 = vmatprep.subr.bf16.mxu0 0
    %117 = vmatpush1.bf16.msra.mxu0 0
    %118 = vmatprep.subr.bf16.mxu0 0
    %119 = vmatpush1.bf16.msra.mxu0 0
    %120 = vmatprep.subr.bf16.mxu0 0
    %121 = vmatpush1.bf16.msra.mxu0 0
    %122 = vmatprep.subr.bf16.mxu0 0
    %123 = vmatpush1.bf16.msra.mxu0 %v103
    %124 = vmatprep.subr.bf16.mxu0 0
    %125 = vmatpush1.bf16.msra.mxu0 %v102
    %126 = vmatprep.subr.bf16.mxu0 0
    %127 = vmatpush2.bf16.msra.mxu0 0
    %128 = vmatprep.subr.bf16.mxu0 0
    %129 = vmatpush2.bf16.msra.mxu0 0
    %130 = vmatprep.subr.bf16.mxu0 0
    %131 = vmatpush2.bf16.msra.mxu0 0
    %132 = vmatprep.subr.bf16.mxu0 0
    %133 = vmatpush2.bf16.msra.mxu0 0
    %134 = vmatprep.subr.bf16.mxu0 0
    %135 = vmatpush2.bf16.msra.mxu0 0
    %136 = vmatprep.subr.bf16.mxu0 0
    %137 = vmatpush2.bf16.msra.mxu0 0
    %138 = vmatprep.subr.bf16.mxu0 0
    %139 = vmatpush2.bf16.msra.mxu0 0
    %140 = vmatprep.subr.bf16.mxu0 0
    %141 = vmatpush2.bf16.msra.mxu0 0
    %142 = vmatprep.mubr.bf16.mxu0 0
    %143 = vmatmul.mubr.bf16.gmra.mxu0 %v108
    %v144 = vpop.f32.mrf.mxu0
    %v145 = vadd.f32 %v93, %v144
    %v146 = vpop.f32.mrf.mxu0
    %v147 = vpop.f32.mrf.mxu0
    %v148 = vpop.f32.mrf.mxu0
    %149 = vdwg.mxu0
    %v150 = vmul.f32 %v145, 0.2
    %v151 = vmax.f32 %v145, %v150
    %v152 = vpack.c.bf16 %v151, %v151
    %s153 = scalar_lea.vmem [#allocation5], 16
    %v154 = vld [vmem:[%s153] sm:$0xf]
    %v155 = vld [vmem:[%s153 + $0x4] sm:$0xf]
    %v156 = vld [vmem:[%s153 + $0x8] sm:$0xf]
    %v157 = vld [vmem:[%s153 + $0xc] sm:$0xf]
    %v158 = vld [vmem:[#allocation7 + $0x1] sm:$0x1]
    %v159 = vlaneseq
    %v160 = vshrl.u32 %v159, 7
    %v161 = vsub.s32 0, %v160
    %v162 = vrot.slane %v158, %v161
    %v167 = vunpack.c.l.b16 %v154
    %v168 = vunpack.c.l.b16 %v155
    %v169 = vunpack.c.l.b16 %v156
    %v170 = vunpack.c.l.b16 %v157
    %v171 = vpack.c.b16 %v168, %v167
    %v172 = vpack.c.b16 %v170, %v169
    %v176 = vsel %vm106, %v152, 0
    %178 = vmatprep.subr.bf16.mxu0 0
    %179 = vmatpush1.bf16.msra.mxu0 0
    %180 = vmatprep.subr.bf16.mxu0 0
    %181 = vmatpush1.bf16.msra.mxu0 0
    %182 = vmatprep.subr.bf16.mxu0 0
    %183 = vmatpush1.bf16.msra.mxu0 0
    %184 = vmatprep.subr.bf16.mxu0 0
    %185 = vmatpush1.bf16.msra.mxu0 0
    %186 = vmatprep.subr.bf16.mxu0 0
    %187 = vmatpush1.bf16.msra.mxu0 0
    %188 = vmatprep.subr.bf16.mxu0 0
    %189 = vmatpush1.bf16.msra.mxu0 0
    %190 = vmatprep.subr.bf16.mxu0 0
    %191 = vmatpush1.bf16.msra.mxu0 %v172
    %192 = vmatprep.subr.bf16.mxu0 0
    %193 = vmatpush1.bf16.msra.mxu0 %v171
    %194 = vmatprep.subr.bf16.mxu0 0
    %195 = vmatpush2.bf16.msra.mxu0 0
    %196 = vmatprep.subr.bf16.mxu0 0
    %197 = vmatpush2.bf16.msra.mxu0 0
    %198 = vmatprep.subr.bf16.mxu0 0
    %199 = vmatpush2.bf16.msra.mxu0 0
    %200 = vmatprep.subr.bf16.mxu0 0
    %201 = vmatpush2.bf16.msra.mxu0 0
    %202 = vmatprep.subr.bf16.mxu0 0
    %203 = vmatpush2.bf16.msra.mxu0 0
    %204 = vmatprep.subr.bf16.mxu0 0
    %205 = vmatpush2.bf16.msra.mxu0 0
    %206 = vmatprep.subr.bf16.mxu0 0
    %207 = vmatpush2.bf16.msra.mxu0 0
    %208 = vmatprep.subr.bf16.mxu0 0
    %209 = vmatpush2.bf16.msra.mxu0 0
    %210 = vmatprep.mubr.bf16.mxu0 0
    %211 = vmatmul.mubr.bf16.gmra.mxu0 %v176
    %v212 = vpop.f32.mrf.mxu0
    %v213 = vadd.f32 %v162, %v212
    %v214 = vpop.f32.mrf.mxu0
    %v215 = vpop.f32.mrf.mxu0
    %v216 = vpop.f32.mrf.mxu0
    %217 = vdwg.mxu0
    %v218 = vmul.f32 %v213, 0.2
    %v219 = vmax.f32 %v213, %v218
    %v220 = vpack.c.bf16 %v219, %v219
    %s221 = scalar_lea.vmem [#allocation5], 32
    %v222 = vld [vmem:[%s221] sm:$0xf]
    %v223 = vld [vmem:[%s221 + $0x4] sm:$0xf]
    %v224 = vld [vmem:[%s221 + $0x8] sm:$0xf]
    %v225 = vld [vmem:[%s221 + $0xc] sm:$0xf]
    %v226 = vld [vmem:[#allocation7 + $0x2] sm:$0x1]
    %v227 = vlaneseq
    %v228 = vshrl.u32 %v227, 7
    %v229 = vsub.s32 0, %v228
    %v230 = vrot.slane %v226, %v229
    %v235 = vunpack.c.l.b16 %v222
    %v236 = vunpack.c.l.b16 %v223
    %v237 = vunpack.c.l.b16 %v224
    %v238 = vunpack.c.l.b16 %v225
    %v239 = vpack.c.b16 %v236, %v235
    %v240 = vpack.c.b16 %v238, %v237
    %v244 = vsel %vm106, %v220, 0
    %246 = vmatprep.subr.bf16.mxu0 0
    %247 = vmatpush1.bf16.msra.mxu0 0
    %248 = vmatprep.subr.bf16.mxu0 0
    %249 = vmatpush1.bf16.msra.mxu0 0
    %250 = vmatprep.subr.bf16.mxu0 0
    %251 = vmatpush1.bf16.msra.mxu0 0
    %252 = vmatprep.subr.bf16.mxu0 0
    %253 = vmatpush1.bf16.msra.mxu0 0
    %254 = vmatprep.subr.bf16.mxu0 0
    %255 = vmatpush1.bf16.msra.mxu0 0
    %256 = vmatprep.subr.bf16.mxu0 0
    %257 = vmatpush1.bf16.msra.mxu0 0
    %258 = vmatprep.subr.bf16.mxu0 0
    %259 = vmatpush1.bf16.msra.mxu0 %v240
    %260 = vmatprep.subr.bf16.mxu0 0
    %261 = vmatpush1.bf16.msra.mxu0 %v239
    %262 = vmatprep.subr.bf16.mxu0 0
    %263 = vmatpush2.bf16.msra.mxu0 0
    %264 = vmatprep.subr.bf16.mxu0 0
    %265 = vmatpush2.bf16.msra.mxu0 0
    %266 = vmatprep.subr.bf16.mxu0 0
    %267 = vmatpush2.bf16.msra.mxu0 0
    %268 = vmatprep.subr.bf16.mxu0 0
    %269 = vmatpush2.bf16.msra.mxu0 0
    %270 = vmatprep.subr.bf16.mxu0 0
    %271 = vmatpush2.bf16.msra.mxu0 0
    %272 = vmatprep.subr.bf16.mxu0 0
    %273 = vmatpush2.bf16.msra.mxu0 0
    %274 = vmatprep.subr.bf16.mxu0 0
    %275 = vmatpush2.bf16.msra.mxu0 0
    %276 = vmatprep.subr.bf16.mxu0 0
    %277 = vmatpush2.bf16.msra.mxu0 0
    %278 = vmatprep.mubr.bf16.mxu0 0
    %279 = vmatmul.mubr.bf16.gmra.mxu0 %v244
    %v280 = vpop.f32.mrf.mxu0
    %v281 = vadd.f32 %v230, %v280
    %v282 = vpop.f32.mrf.mxu0
    %v283 = vpop.f32.mrf.mxu0
    %v284 = vpop.f32.mrf.mxu0
    %285 = vdwg.mxu0
    %v286 = vmul.f32 %v281, 0.2
    %v287 = vmax.f32 %v281, %v286
    %v288 = vpack.c.bf16 %v287, %v287
    %s289 = scalar_lea.vmem [#allocation5], 48
    %v290 = vld [vmem:[%s289] sm:$0xf]
    %v291 = vld [vmem:[%s289 + $0x4] sm:$0xf]
    %v292 = vld [vmem:[%s289 + $0x8] sm:$0xf]
    %v293 = vld [vmem:[%s289 + $0xc] sm:$0xf]
    %v294 = vld [vmem:[#allocation7 + $0x3] sm:$0x1]
    %v295 = vlaneseq
    %v296 = vshrl.u32 %v295, 7
    %v297 = vsub.s32 0, %v296
    %v298 = vrot.slane %v294, %v297
    %v303 = vunpack.c.l.b16 %v290
    %v304 = vunpack.c.l.b16 %v291
    %v305 = vunpack.c.l.b16 %v292
    %v306 = vunpack.c.l.b16 %v293
    %v307 = vpack.c.b16 %v304, %v303
    %v308 = vpack.c.b16 %v306, %v305
    %v312 = vsel %vm106, %v288, 0
    %314 = vmatprep.subr.bf16.mxu0 0
    %315 = vmatpush1.bf16.msra.mxu0 0
    %316 = vmatprep.subr.bf16.mxu0 0
    %317 = vmatpush1.bf16.msra.mxu0 0
    %318 = vmatprep.subr.bf16.mxu0 0
    %319 = vmatpush1.bf16.msra.mxu0 0
    %320 = vmatprep.subr.bf16.mxu0 0
    %321 = vmatpush1.bf16.msra.mxu0 0
    %322 = vmatprep.subr.bf16.mxu0 0
    %323 = vmatpush1.bf16.msra.mxu0 0
    %324 = vmatprep.subr.bf16.mxu0 0
    %325 = vmatpush1.bf16.msra.mxu0 0
    %326 = vmatprep.subr.bf16.mxu0 0
    %327 = vmatpush1.bf16.msra.mxu0 %v308
    %328 = vmatprep.subr.bf16.mxu0 0
    %329 = vmatpush1.bf16.msra.mxu0 %v307
    %330 = vmatprep.subr.bf16.mxu0 0
    %331 = vmatpush2.bf16.msra.mxu0 0
    %332 = vmatprep.subr.bf16.mxu0 0
    %333 = vmatpush2.bf16.msra.mxu0 0
    %334 = vmatprep.subr.bf16.mxu0 0
    %335 = vmatpush2.bf16.msra.mxu0 0
    %336 = vmatprep.subr.bf16.mxu0 0
    %337 = vmatpush2.bf16.msra.mxu0 0
    %338 = vmatprep.subr.bf16.mxu0 0
    %339 = vmatpush2.bf16.msra.mxu0 0
    %340 = vmatprep.subr.bf16.mxu0 0
    %341 = vmatpush2.bf16.msra.mxu0 0
    %342 = vmatprep.subr.bf16.mxu0 0
    %343 = vmatpush2.bf16.msra.mxu0 0
    %344 = vmatprep.subr.bf16.mxu0 0
    %345 = vmatpush2.bf16.msra.mxu0 0
    %346 = vmatprep.mubr.bf16.mxu0 0
    %347 = vmatmul.mubr.bf16.gmra.mxu0 %v312
    %v348 = vpop.f32.mrf.mxu0
    %v349 = vadd.f32 %v298, %v348
    %v350 = vpop.f32.mrf.mxu0
    %v351 = vpop.f32.mrf.mxu0
    %v352 = vpop.f32.mrf.mxu0
    %353 = vdwg.mxu0
    %v354 = vmul.f32 %v349, 0.2
    %v355 = vmax.f32 %v349, %v354
    %v356 = vpack.c.bf16 %v355, %v355
    %s357 = scalar_lea.vmem [#allocation5], 64
    %v358 = vld [vmem:[%s357] sm:$0xf]
    %v359 = vld [vmem:[%s357 + $0x4] sm:$0xf]
    %v360 = vld [vmem:[%s357 + $0x8] sm:$0xf]
    %v361 = vld [vmem:[%s357 + $0xc] sm:$0xf]
    %v362 = vld [vmem:[#allocation7 + $0x4] sm:$0x1]
    %v363 = vlaneseq
    %v364 = vshrl.u32 %v363, 7
    %v365 = vsub.s32 0, %v364
    %v366 = vrot.slane %v362, %v365
    %v371 = vunpack.c.l.b16 %v358
    %v372 = vunpack.c.l.b16 %v359
    %v373 = vunpack.c.l.b16 %v360
    %v374 = vunpack.c.l.b16 %v361
    %v375 = vpack.c.b16 %v372, %v371
    %v376 = vpack.c.b16 %v374, %v373
    %v380 = vsel %vm106, %v356, 0
    %382 = vmatprep.subr.bf16.mxu0 0
    %383 = vmatpush1.bf16.msra.mxu0 0
    %384 = vmatprep.subr.bf16.mxu0 0
    %385 = vmatpush1.bf16.msra.mxu0 0
    %386 = vmatprep.subr.bf16.mxu0 0
    %387 = vmatpush1.bf16.msra.mxu0 0
    %388 = vmatprep.subr.bf16.mxu0 0
    %389 = vmatpush1.bf16.msra.mxu0 0
    %390 = vmatprep.subr.bf16.mxu0 0
    %391 = vmatpush1.bf16.msra.mxu0 0
    %392 = vmatprep.subr.bf16.mxu0 0
    %393 = vmatpush1.bf16.msra.mxu0 0
    %394 = vmatprep.subr.bf16.mxu0 0
    %395 = vmatpush1.bf16.msra.mxu0 %v376
    %396 = vmatprep.subr.bf16.mxu0 0
    %397 = vmatpush1.bf16.msra.mxu0 %v375
    %398 = vmatprep.subr.bf16.mxu0 0
    %399 = vmatpush2.bf16.msra.mxu0 0
    %400 = vmatprep.subr.bf16.mxu0 0
    %401 = vmatpush2.bf16.msra.mxu0 0
    %402 = vmatprep.subr.bf16.mxu0 0
    %403 = vmatpush2.bf16.msra.mxu0 0
    %404 = vmatprep.subr.bf16.mxu0 0
    %405 = vmatpush2.bf16.msra.mxu0 0
    %406 = vmatprep.subr.bf16.mxu0 0
    %407 = vmatpush2.bf16.msra.mxu0 0
    %408 = vmatprep.subr.bf16.mxu0 0
    %409 = vmatpush2.bf16.msra.mxu0 0
    %410 = vmatprep.subr.bf16.mxu0 0
    %411 = vmatpush2.bf16.msra.mxu0 0
    %412 = vmatprep.subr.bf16.mxu0 0
    %413 = vmatpush2.bf16.msra.mxu0 0
    %414 = vmatprep.mubr.bf16.mxu0 0
    %415 = vmatmul.mubr.bf16.gmra.mxu0 %v380
    %v416 = vpop.f32.mrf.mxu0
    %v417 = vadd.f32 %v366, %v416
    %v418 = vpop.f32.mrf.mxu0
    %v419 = vpop.f32.mrf.mxu0
    %v420 = vpop.f32.mrf.mxu0
    %421 = vdwg.mxu0
    %v422 = vmul.f32 %v417, 0.2
    %v423 = vmax.f32 %v417, %v422
    %v424 = vpack.c.bf16 %v423, %v423
    %s425 = scalar_lea.vmem [#allocation5], 80
    %v426 = vld [vmem:[%s425] sm:$0xf]
    %v427 = vld [vmem:[%s425 + $0x4] sm:$0xf]
    %v428 = vld [vmem:[%s425 + $0x8] sm:$0xf]
    %v429 = vld [vmem:[%s425 + $0xc] sm:$0xf]
    %v430 = vld [vmem:[#allocation7 + $0x5] sm:$0x1]
    %v431 = vlaneseq
    %v432 = vshrl.u32 %v431, 7
    %v433 = vsub.s32 0, %v432
    %v434 = vrot.slane %v430, %v433
    %v439 = vunpack.c.l.b16 %v426
    %v440 = vunpack.c.l.b16 %v427
    %v441 = vunpack.c.l.b16 %v428
    %v442 = vunpack.c.l.b16 %v429
    %v443 = vpack.c.b16 %v440, %v439
    %v444 = vpack.c.b16 %v442, %v441
    %v448 = vsel %vm106, %v424, 0
    %450 = vmatprep.subr.bf16.mxu0 0
    %451 = vmatpush1.bf16.msra.mxu0 0
    %452 = vmatprep.subr.bf16.mxu0 0
    %453 = vmatpush1.bf16.msra.mxu0 0
    %454 = vmatprep.subr.bf16.mxu0 0
    %455 = vmatpush1.bf16.msra.mxu0 0
    %456 = vmatprep.subr.bf16.mxu0 0
    %457 = vmatpush1.bf16.msra.mxu0 0
    %458 = vmatprep.subr.bf16.mxu0 0
    %459 = vmatpush1.bf16.msra.mxu0 0
    %460 = vmatprep.subr.bf16.mxu0 0
    %461 = vmatpush1.bf16.msra.mxu0 0
    %462 = vmatprep.subr.bf16.mxu0 0
    %463 = vmatpush1.bf16.msra.mxu0 %v444
    %464 = vmatprep.subr.bf16.mxu0 0
    %465 = vmatpush1.bf16.msra.mxu0 %v443
    %466 = vmatprep.subr.bf16.mxu0 0
    %467 = vmatpush2.bf16.msra.mxu0 0
    %468 = vmatprep.subr.bf16.mxu0 0
    %469 = vmatpush2.bf16.msra.mxu0 0
    %470 = vmatprep.subr.bf16.mxu0 0
    %471 = vmatpush2.bf16.msra.mxu0 0
    %472 = vmatprep.subr.bf16.mxu0 0
    %473 = vmatpush2.bf16.msra.mxu0 0
    %474 = vmatprep.subr.bf16.mxu0 0
    %475 = vmatpush2.bf16.msra.mxu0 0
    %476 = vmatprep.subr.bf16.mxu0 0
    %477 = vmatpush2.bf16.msra.mxu0 0
    %478 = vmatprep.subr.bf16.mxu0 0
    %479 = vmatpush2.bf16.msra.mxu0 0
    %480 = vmatprep.subr.bf16.mxu0 0
    %481 = vmatpush2.bf16.msra.mxu0 0
    %482 = vmatprep.mubr.bf16.mxu0 0
    %483 = vmatmul.mubr.bf16.gmra.mxu0 %v448
    %v484 = vpop.f32.mrf.mxu0
    %v485 = vadd.f32 %v434, %v484
    %v486 = vpop.f32.mrf.mxu0
    %v487 = vpop.f32.mrf.mxu0
    %v488 = vpop.f32.mrf.mxu0
    %489 = vdwg.mxu0
    %v490 = vmul.f32 %v485, 0.2
    %v491 = vmax.f32 %v485, %v490
    %v492 = vpack.c.bf16 %v491, %v491
    %s493 = scalar_lea.vmem [#allocation5], 96
    %v494 = vld [vmem:[%s493] sm:$0xf]
    %v495 = vld [vmem:[%s493 + $0x4] sm:$0xf]
    %v496 = vld [vmem:[%s493 + $0x8] sm:$0xf]
    %v497 = vld [vmem:[%s493 + $0xc] sm:$0xf]
    %v498 = vld [vmem:[#allocation7 + $0x6] sm:$0x1]
    %v499 = vlaneseq
    %v500 = vshrl.u32 %v499, 7
    %v501 = vsub.s32 0, %v500
    %v502 = vrot.slane %v498, %v501
    %v507 = vunpack.c.l.b16 %v494
    %v508 = vunpack.c.l.b16 %v495
    %v509 = vunpack.c.l.b16 %v496
    %v510 = vunpack.c.l.b16 %v497
    %v511 = vpack.c.b16 %v508, %v507
    %v512 = vpack.c.b16 %v510, %v509
    %v516 = vsel %vm106, %v492, 0
    %518 = vmatprep.subr.bf16.mxu0 0
    %519 = vmatpush1.bf16.msra.mxu0 0
    %520 = vmatprep.subr.bf16.mxu0 0
    %521 = vmatpush1.bf16.msra.mxu0 0
    %522 = vmatprep.subr.bf16.mxu0 0
    %523 = vmatpush1.bf16.msra.mxu0 0
    %524 = vmatprep.subr.bf16.mxu0 0
    %525 = vmatpush1.bf16.msra.mxu0 0
    %526 = vmatprep.subr.bf16.mxu0 0
    %527 = vmatpush1.bf16.msra.mxu0 0
    %528 = vmatprep.subr.bf16.mxu0 0
    %529 = vmatpush1.bf16.msra.mxu0 0
    %530 = vmatprep.subr.bf16.mxu0 0
    %531 = vmatpush1.bf16.msra.mxu0 %v512
    %532 = vmatprep.subr.bf16.mxu0 0
    %533 = vmatpush1.bf16.msra.mxu0 %v511
    %534 = vmatprep.subr.bf16.mxu0 0
    %535 = vmatpush2.bf16.msra.mxu0 0
    %536 = vmatprep.subr.bf16.mxu0 0
    %537 = vmatpush2.bf16.msra.mxu0 0
    %538 = vmatprep.subr.bf16.mxu0 0
    %539 = vmatpush2.bf16.msra.mxu0 0
    %540 = vmatprep.subr.bf16.mxu0 0
    %541 = vmatpush2.bf16.msra.mxu0 0
    %542 = vmatprep.subr.bf16.mxu0 0
    %543 = vmatpush2.bf16.msra.mxu0 0
    %544 = vmatprep.subr.bf16.mxu0 0
    %545 = vmatpush2.bf16.msra.mxu0 0
    %546 = vmatprep.subr.bf16.mxu0 0
    %547 = vmatpush2.bf16.msra.mxu0 0
    %548 = vmatprep.subr.bf16.mxu0 0
    %549 = vmatpush2.bf16.msra.mxu0 0
    %550 = vmatprep.mubr.bf16.mxu0 0
    %551 = vmatmul.mubr.bf16.gmra.mxu0 %v516
    %v552 = vpop.f32.mrf.mxu0
    %v553 = vadd.f32 %v502, %v552
    %v554 = vpop.f32.mrf.mxu0
    %v555 = vpop.f32.mrf.mxu0
    %v556 = vpop.f32.mrf.mxu0
    %557 = vdwg.mxu0
    %v558 = vmul.f32 %v553, 0.2
    %v559 = vmax.f32 %v553, %v558
    %v560 = vpack.c.bf16 %v559, %v559
    %v561 = vld [vmem:[#allocation8] sm:$0xf]
    %v562 = vld [vmem:[#allocation8 + $0x4] sm:$0xf]
    %v563 = vld [vmem:[#allocation8 + $0x8] sm:$0xf]
    %v564 = vld [vmem:[#allocation8 + $0xc] sm:$0xf]
    %v565 = vld [vmem:[%s4] sm:$0x1]
    %v567 = vlaneseq
    %v568 = vshrl.u32 %v567, 7
    %v569 = vsub.s32 0, %v568
    %v570 = vrot.slane %v565, %v569
    %v576 = vunpack.c.l.b16 %v561
    %v577 = vunpack.c.l.b16 %v562
    %v578 = vunpack.c.l.b16 %v563
    %v579 = vunpack.c.l.b16 %v564
    %v580 = vpack.c.b16 %v577, %v576
    %v581 = vpack.c.b16 %v579, %v578
    %v585 = vsel %vm106, %v560, 0
    %587 = vmatprep.subr.bf16.mxu0 0
    %588 = vmatpush1.bf16.msra.mxu0 0
    %589 = vmatprep.subr.bf16.mxu0 0
    %590 = vmatpush1.bf16.msra.mxu0 0
    %591 = vmatprep.subr.bf16.mxu0 0
    %592 = vmatpush1.bf16.msra.mxu0 0
    %593 = vmatprep.subr.bf16.mxu0 0
    %594 = vmatpush1.bf16.msra.mxu0 0
    %595 = vmatprep.subr.bf16.mxu0 0
    %596 = vmatpush1.bf16.msra.mxu0 0
    %597 = vmatprep.subr.bf16.mxu0 0
    %598 = vmatpush1.bf16.msra.mxu0 0
    %599 = vmatprep.subr.bf16.mxu0 0
    %600 = vmatpush1.bf16.msra.mxu0 %v581
    %601 = vmatprep.subr.bf16.mxu0 0
    %602 = vmatpush1.bf16.msra.mxu0 %v580
    %603 = vmatprep.subr.bf16.mxu0 0
    %604 = vmatpush2.bf16.msra.mxu0 0
    %605 = vmatprep.subr.bf16.mxu0 0
    %606 = vmatpush2.bf16.msra.mxu0 0
    %607 = vmatprep.subr.bf16.mxu0 0
    %608 = vmatpush2.bf16.msra.mxu0 0
    %609 = vmatprep.subr.bf16.mxu0 0
    %610 = vmatpush2.bf16.msra.mxu0 0
    %611 = vmatprep.subr.bf16.mxu0 0
    %612 = vmatpush2.bf16.msra.mxu0 0
    %613 = vmatprep.subr.bf16.mxu0 0
    %614 = vmatpush2.bf16.msra.mxu0 0
    %615 = vmatprep.subr.bf16.mxu0 0
    %616 = vmatpush2.bf16.msra.mxu0 0
    %617 = vmatprep.subr.bf16.mxu0 0
    %618 = vmatpush2.bf16.msra.mxu0 0
    %619 = vmatprep.mubr.bf16.mxu0 0
    %620 = vmatmul.mubr.bf16.gmra.mxu0 %v585
    %v621 = vpop.f32.mrf.mxu0
    %v622 = vadd.f32 %v570, %v621
    %v623 = vpop.f32.mrf.mxu0
    %v624 = vpop.f32.mrf.mxu0
    %v625 = vpop.f32.mrf.mxu0
    %626 = vdwg.mxu0
    %v627 = vmul.f32 %v622, 0.2
    %v628 = vmax.f32 %v622, %v627
    %629 = vst.msk [vmem:[#allocation10] sm:$0x3] %vm75, %v628
    // Predicated region
    $region38: #{tpu_custom_call.1} parent=1 // pred_check
      _
    $region39: #{tpu_custom_call.1} parent=1 // pred_check_branch
      %631 = sbr.rel (0) target = $region41
    $region40: #{tpu_custom_call.1} parent=1 // pred_region
      %s633 = ssub.s32 32, 32
      %634 = vsyncadd [#allocation4], %s633
      %s636 = sshll.u32 [#allocation10], 4
      %s637 = int_to_ptr.vmem [resolvable:$true] %s636
      %639 = dma.vmem_to_hbm [thread:$0]  %s637, 32, %s5, [#allocation4]
    $region41: #{tpu_custom_call.1} parent=1 // pred_fallthru
      _
    // Predicated region
    $region42: #{tpu_custom_call.1} parent=1 // pred_check
      _
    $region43: #{tpu_custom_call.1} parent=1 // pred_check_branch
      %641 = sbr.rel (0) target = $region45
    $region44: #{tpu_custom_call.1} parent=1 // pred_region
      %642 = dma.done [#allocation4], 32
    $region45: #{tpu_custom_call.1} parent=1 // pred_fallthru
      _
    %643 = vsyncpa [#allocation3], 1
    %644 = vsyncpa [#allocation6], 1
    %645 = vsyncpa [#allocation9], 1
    %646 = vsyncpa [#allocation4], 1

// kernel: tpu_custom_call.1
$region0: #{tpu_custom_call.1}
  #allocation0 [shape = 'u32[]', space=smem, size = 0x4, offset = 0x4, fixed_abs, tag = 'smem constant byte address 0x4 - core index']
  #allocation1 [shape = 'u32[144,128]{1,0:T(1,128)}', space=vmem, size = 0x12000, scoped, tag = 'internal scratch']
  %s0 = inlined_call_operand.hbm [shape: f32[2,32], index: 0, kind: input, shape index: {}]
  %s1 = inlined_call_operand.hbm [shape: bf16[7,32,32], index: 1, kind: input, shape index: {}]
  %s2 = inlined_call_operand.hbm [shape: f32[7,32], index: 2, kind: input, shape index: {}]
  %s3 = inlined_call_operand.hbm [shape: bf16[32,32], index: 3, kind: input, shape index: {}]
  %s4 = inlined_call_operand.vmem [shape: f32[1,32], index: 4, kind: input, shape index: {}]
  %s5 = inlined_call_operand.hbm [shape: f32[2,32], index: 5, kind: output, shape index: {}]
  %s6 = sld [smem:[#allocation0]]
  $region46: #{tpu_custom_call.1} parent=0
    _
  %s8 = ssub.s32 1, %s6
  %s9 = scalar_select 0, %s8, %s6
  $region1: #{tpu_custom_call.1} parent=0
    #allocation2 [shape = 'u8[1024]{0}', space=vmem, size = 0x400, scoped, tag = 'input window, operand 0, single buffered']
    #allocation3 [shape = 's32[1]{0}', space=sflag, size = 0x4, scoped, tag = 'scoped memory for tpu_custom_call.1']
    #allocation4 [shape = 's32[1]{0}', space=sflag, size = 0x4, scoped, tag = 'scoped memory for tpu_custom_call.1']
    #allocation5 [shape = 'u8[57344]{0}', space=vmem, size = 0xe000, scoped, tag = 'input window, operand 1, single buffered']
    #allocation6 [shape = 's32[1]{0}', space=sflag, size = 0x4, scoped, tag = 'scoped memory for tpu_custom_call.1']
    #allocation7 [shape = 'u8[4096]{0}', space=vmem, size = 0x1000, scoped, tag = 'input window, operand 2, single buffered']
    #allocation8 [shape = 'u8[8192]{0}', space=vmem, size = 0x2000, scoped, tag = 'input window, operand 3, single buffered']
    #allocation9 [shape = 's32[1]{0}', space=sflag, size = 0x4, scoped, tag = 'scoped memory for tpu_custom_call.1']
    #allocation10 [shape = 'u8[1024]{0}', space=vmem, size = 0x400, scoped, tag = 'output window, operand 0, single buffered']
    %10 = vsyncpa [#allocation3], 0
    %11 = vsyncpa [#allocation6], 0
    %12 = vsyncpa [#allocation9], 0
    %13 = vsyncpa [#allocation4], 0
    // Predicated region
    $region2: #{tpu_custom_call.1} parent=1 // pred_check
      _
    $region3: #{tpu_custom_call.1} parent=1 // pred_check_branch
      %15 = sbr.rel (0) target = $region5
    $region4: #{tpu_custom_call.1} parent=1 // pred_region
      %s17 = ssub.s32 32, 32
      %18 = vsyncadd [#allocation3], %s17
      %s20 = sshll.u32 [#allocation2], 4
      %s21 = int_to_ptr.vmem [resolvable:$true] %s20
      %23 = dma.hbm_to_vmem [thread:$0]  %s0, 32, %s21, [#allocation3]
    $region5: #{tpu_custom_call.1} parent=1 // pred_fallthru
      _
    // Predicated region
    $region6: #{tpu_custom_call.1} parent=1 // pred_check
      _
    $region7: #{tpu_custom_call.1} parent=1 // pred_check_branch
      %25 = sbr.rel (0) target = $region9
    $region8: #{tpu_custom_call.1} parent=1 // pred_region
      %s27 = ssub.s32 1792, 1792
      %28 = vsyncadd [#allocation6], %s27
      %s29 = sshll.u32 [#allocation5], 4
      %s30 = int_to_ptr.vmem [resolvable:$true] %s29
      %35 = dma.hbm_to_vmem [thread:$0]  %s1, 1792, %s30, [#allocation6], 64, 64, 4
    $region9: #{tpu_custom_call.1} parent=1 // pred_fallthru
      _
    // Predicated region
    $region10: #{tpu_custom_call.1} parent=1 // pred_check
      _
    $region11: #{tpu_custom_call.1} parent=1 // pred_check_branch
      %37 = sbr.rel (0) target = $region13
    $region12: #{tpu_custom_call.1} parent=1 // pred_region
      %s39 = ssub.s32 128, 128
      %40 = vsyncadd [#allocation6], %s39
      %s42 = sshll.u32 [#allocation7], 4
      %s43 = int_to_ptr.vmem [resolvable:$true] %s42
      %45 = dma.hbm_to_vmem [thread:$0]  %s2, 128, %s43, [#allocation6]
    $region13: #{tpu_custom_call.1} parent=1 // pred_fallthru
      _
    // Predicated region
    $region14: #{tpu_custom_call.1} parent=1 // pred_check
      _
    $region15: #{tpu_custom_call.1} parent=1 // pred_check_branch
      %47 = sbr.rel (0) target = $region17
    $region16: #{tpu_custom_call.1} parent=1 // pred_region
      %s49 = ssub.s32 256, 256
      %50 = vsyncadd [#allocation9], %s49
      %s51 = sshll.u32 [#allocation8], 4
      %s52 = int_to_ptr.vmem [resolvable:$true] %s51
      %57 = dma.hbm_to_vmem [thread:$0]  %s3, 256, %s52, [#allocation9], 64, 64, 4
    $region17: #{tpu_custom_call.1} parent=1 // pred_fallthru
      _
    // Predicated region
    $region18: #{tpu_custom_call.1} parent=1 // pred_check
      _
    $region19: #{tpu_custom_call.1} parent=1 // pred_check_branch
      %59 = sbr.rel (0) target = $region21
    $region20: #{tpu_custom_call.1} parent=1 // pred_region
      _
    $region21: #{tpu_custom_call.1} parent=1 // pred_fallthru
      _
    // Predicated region
    $region22: #{tpu_custom_call.1} parent=1 // pred_check
      _
    $region23: #{tpu_custom_call.1} parent=1 // pred_check_branch
      %61 = sbr.rel (0) target = $region25
    $region24: #{tpu_custom_call.1} parent=1 // pred_region
      %62 = dma.done [#allocation3], 32
    $region25: #{tpu_custom_call.1} parent=1 // pred_fallthru
      _
    // Predicated region
    $region26: #{tpu_custom_call.1} parent=1 // pred_check
      _
    $region27: #{tpu_custom_call.1} parent=1 // pred_check_branch
      %64 = sbr.rel (0) target = $region29
    $region28: #{tpu_custom_call.1} parent=1 // pred_region
      %65 = dma.done [#allocation6], 1792
    $region29: #{tpu_custom_call.1} parent=1 // pred_fallthru
      _
    // Predicated region
    $region30: #{tpu_custom_call.1} parent=1 // pred_check
      _
    $region31: #{tpu_custom_call.1} parent=1 // pred_check_branch
      %67 = sbr.rel (0) target = $region33
    $region32: #{tpu_custom_call.1} parent=1 // pred_region
      %68 = dma.done [#allocation6], 128
    $region33: #{tpu_custom_call.1} parent=1 // pred_fallthru
      _
    // Predicated region
    $region34: #{tpu_custom_call.1} parent=1 // pred_check
      _
    $region35: #{tpu_custom_call.1} parent=1 // pred_check_branch
      %70 = sbr.rel (0) target = $region37
    $region36: #{tpu_custom_call.1} parent=1 // pred_region
      %71 = dma.done [#allocation9], 256
    $region37: #{tpu_custom_call.1} parent=1 // pred_fallthru
      _
    %v73 = vld [vmem:[#allocation2] sm:$0x3]
    %v74 = vmul.f32 %v73, %v73
    %vm75 = vcmask 254976
    %v76 = vsel %vm75, %v74, 0.0
    %77 = vadd.xlane.f32.xlu0 %v76
    %v78 = vpop.xlane.xlu0 %77
    %v79 = vrcp.pop 32.0
    %v80 = vmul.f32 %v78, %v79
    %v81 = vadd.f32 %v80, 1e-08
    %v82 = vrsqrt.pop %v81
    %v83 = vmul.f32 %v73, %v82
    %v84 = vpack.c.bf16 %v83, %v83
    %v85 = vld [vmem:[#allocation5] sm:$0xf]
    %v86 = vld [vmem:[#allocation5 + $0x4] sm:$0xf]
    %v87 = vld [vmem:[#allocation5 + $0x8] sm:$0xf]
    %v88 = vld [vmem:[#allocation5 + $0xc] sm:$0xf]
    %v89 = vld [vmem:[#allocation7] sm:$0x1]
    %v90 = vlaneseq
    %v91 = vshrl.u32 %v90, 7
    %v92 = vsub.s32 0, %v91
    %v93 = vrot.slane %v89, %v92
    %v98 = vunpack.c.l.b16 %v85
    %v99 = vunpack.c.l.b16 %v86
    %v100 = vunpack.c.l.b16 %v87
    %v101 = vunpack.c.l.b16 %v88
    %v102 = vpack.c.b16 %v99, %v98
    %v103 = vpack.c.b16 %v101, %v100
    %vm106 = vcmask 261120
    %v108 = vsel %vm106, %v84, 0
    %110 = vmatprep.subr.bf16.mxu0 0
    %111 = vmatpush1.bf16.msra.mxu0 0
    %112 = vmatprep.subr.bf16.mxu0 0
    %113 = vmatpush1.bf16.msra.mxu0 0
    %114 = vmatprep.subr.bf16.mxu0 0
    %115 = vmatpush1.bf16.msra.mxu0 0
    %116 = vmatprep.subr.bf16.mxu0 0
    %117 = vmatpush1.bf16.msra.mxu0 0
    %118 = vmatprep.subr.bf16.mxu0 0
    %119 = vmatpush1.bf16.msra.mxu0 0
    %120 = vmatprep.subr.bf16.mxu0 0
    %121 = vmatpush1.bf16.msra.mxu0 0
    %122 = vmatprep.subr.bf16.mxu0 0
    %123 = vmatpush1.bf16.msra.mxu0 %v103
    %124 = vmatprep.subr.bf16.mxu0 0
    %125 = vmatpush1.bf16.msra.mxu0 %v102
    %126 = vmatprep.subr.bf16.mxu0 0
    %127 = vmatpush2.bf16.msra.mxu0 0
    %128 = vmatprep.subr.bf16.mxu0 0
    %129 = vmatpush2.bf16.msra.mxu0 0
    %130 = vmatprep.subr.bf16.mxu0 0
    %131 = vmatpush2.bf16.msra.mxu0 0
    %132 = vmatprep.subr.bf16.mxu0 0
    %133 = vmatpush2.bf16.msra.mxu0 0
    %134 = vmatprep.subr.bf16.mxu0 0
    %135 = vmatpush2.bf16.msra.mxu0 0
    %136 = vmatprep.subr.bf16.mxu0 0
    %137 = vmatpush2.bf16.msra.mxu0 0
    %138 = vmatprep.subr.bf16.mxu0 0
    %139 = vmatpush2.bf16.msra.mxu0 0
    %140 = vmatprep.subr.bf16.mxu0 0
    %141 = vmatpush2.bf16.msra.mxu0 0
    %142 = vmatprep.mubr.bf16.mxu0 0
    %143 = vmatmul.mubr.bf16.gmra.mxu0 %v108
    %v144 = vpop.f32.mrf.mxu0
    %v145 = vadd.f32 %v93, %v144
    %v146 = vpop.f32.mrf.mxu0
    %v147 = vpop.f32.mrf.mxu0
    %v148 = vpop.f32.mrf.mxu0
    %149 = vdwg.mxu0
    %v150 = vmul.f32 %v145, 0.2
    %v151 = vmax.f32 %v145, %v150
    %v152 = vpack.c.bf16 %v151, %v151
    %s153 = scalar_lea.vmem [#allocation5], 16
    %v154 = vld [vmem:[%s153] sm:$0xf]
    %v155 = vld [vmem:[%s153 + $0x4] sm:$0xf]
    %v156 = vld [vmem:[%s153 + $0x8] sm:$0xf]
    %v157 = vld [vmem:[%s153 + $0xc] sm:$0xf]
    %v158 = vld [vmem:[#allocation7 + $0x1] sm:$0x1]
    %v159 = vlaneseq
    %v160 = vshrl.u32 %v159, 7
    %v161 = vsub.s32 0, %v160
    %v162 = vrot.slane %v158, %v161
    %v167 = vunpack.c.l.b16 %v154
    %v168 = vunpack.c.l.b16 %v155
    %v169 = vunpack.c.l.b16 %v156
    %v170 = vunpack.c.l.b16 %v157
    %v171 = vpack.c.b16 %v168, %v167
    %v172 = vpack.c.b16 %v170, %v169
    %v176 = vsel %vm106, %v152, 0
    %178 = vmatprep.subr.bf16.mxu0 0
    %179 = vmatpush1.bf16.msra.mxu0 0
    %180 = vmatprep.subr.bf16.mxu0 0
    %181 = vmatpush1.bf16.msra.mxu0 0
    %182 = vmatprep.subr.bf16.mxu0 0
    %183 = vmatpush1.bf16.msra.mxu0 0
    %184 = vmatprep.subr.bf16.mxu0 0
    %185 = vmatpush1.bf16.msra.mxu0 0
    %186 = vmatprep.subr.bf16.mxu0 0
    %187 = vmatpush1.bf16.msra.mxu0 0
    %188 = vmatprep.subr.bf16.mxu0 0
    %189 = vmatpush1.bf16.msra.mxu0 0
    %190 = vmatprep.subr.bf16.mxu0 0
    %191 = vmatpush1.bf16.msra.mxu0 %v172
    %192 = vmatprep.subr.bf16.mxu0 0
    %193 = vmatpush1.bf16.msra.mxu0 %v171
    %194 = vmatprep.subr.bf16.mxu0 0
    %195 = vmatpush2.bf16.msra.mxu0 0
    %196 = vmatprep.subr.bf16.mxu0 0
    %197 = vmatpush2.bf16.msra.mxu0 0
    %198 = vmatprep.subr.bf16.mxu0 0
    %199 = vmatpush2.bf16.msra.mxu0 0
    %200 = vmatprep.subr.bf16.mxu0 0
    %201 = vmatpush2.bf16.msra.mxu0 0
    %202 = vmatprep.subr.bf16.mxu0 0
    %203 = vmatpush2.bf16.msra.mxu0 0
    %204 = vmatprep.subr.bf16.mxu0 0
    %205 = vmatpush2.bf16.msra.mxu0 0
    %206 = vmatprep.subr.bf16.mxu0 0
    %207 = vmatpush2.bf16.msra.mxu0 0
    %208 = vmatprep.subr.bf16.mxu0 0
    %209 = vmatpush2.bf16.msra.mxu0 0
    %210 = vmatprep.mubr.bf16.mxu0 0
    %211 = vmatmul.mubr.bf16.gmra.mxu0 %v176
    %v212 = vpop.f32.mrf.mxu0
    %v213 = vadd.f32 %v162, %v212
    %v214 = vpop.f32.mrf.mxu0
    %v215 = vpop.f32.mrf.mxu0
    %v216 = vpop.f32.mrf.mxu0
    %217 = vdwg.mxu0
    %v218 = vmul.f32 %v213, 0.2
    %v219 = vmax.f32 %v213, %v218
    %v220 = vpack.c.bf16 %v219, %v219
    %s221 = scalar_lea.vmem [#allocation5], 32
    %v222 = vld [vmem:[%s221] sm:$0xf]
    %v223 = vld [vmem:[%s221 + $0x4] sm:$0xf]
    %v224 = vld [vmem:[%s221 + $0x8] sm:$0xf]
    %v225 = vld [vmem:[%s221 + $0xc] sm:$0xf]
    %v226 = vld [vmem:[#allocation7 + $0x2] sm:$0x1]
    %v227 = vlaneseq
    %v228 = vshrl.u32 %v227, 7
    %v229 = vsub.s32 0, %v228
    %v230 = vrot.slane %v226, %v229
    %v235 = vunpack.c.l.b16 %v222
    %v236 = vunpack.c.l.b16 %v223
    %v237 = vunpack.c.l.b16 %v224
    %v238 = vunpack.c.l.b16 %v225
    %v239 = vpack.c.b16 %v236, %v235
    %v240 = vpack.c.b16 %v238, %v237
    %v244 = vsel %vm106, %v220, 0
    %246 = vmatprep.subr.bf16.mxu0 0
    %247 = vmatpush1.bf16.msra.mxu0 0
    %248 = vmatprep.subr.bf16.mxu0 0
    %249 = vmatpush1.bf16.msra.mxu0 0
    %250 = vmatprep.subr.bf16.mxu0 0
    %251 = vmatpush1.bf16.msra.mxu0 0
    %252 = vmatprep.subr.bf16.mxu0 0
    %253 = vmatpush1.bf16.msra.mxu0 0
    %254 = vmatprep.subr.bf16.mxu0 0
    %255 = vmatpush1.bf16.msra.mxu0 0
    %256 = vmatprep.subr.bf16.mxu0 0
    %257 = vmatpush1.bf16.msra.mxu0 0
    %258 = vmatprep.subr.bf16.mxu0 0
    %259 = vmatpush1.bf16.msra.mxu0 %v240
    %260 = vmatprep.subr.bf16.mxu0 0
    %261 = vmatpush1.bf16.msra.mxu0 %v239
    %262 = vmatprep.subr.bf16.mxu0 0
    %263 = vmatpush2.bf16.msra.mxu0 0
    %264 = vmatprep.subr.bf16.mxu0 0
    %265 = vmatpush2.bf16.msra.mxu0 0
    %266 = vmatprep.subr.bf16.mxu0 0
    %267 = vmatpush2.bf16.msra.mxu0 0
    %268 = vmatprep.subr.bf16.mxu0 0
    %269 = vmatpush2.bf16.msra.mxu0 0
    %270 = vmatprep.subr.bf16.mxu0 0
    %271 = vmatpush2.bf16.msra.mxu0 0
    %272 = vmatprep.subr.bf16.mxu0 0
    %273 = vmatpush2.bf16.msra.mxu0 0
    %274 = vmatprep.subr.bf16.mxu0 0
    %275 = vmatpush2.bf16.msra.mxu0 0
    %276 = vmatprep.subr.bf16.mxu0 0
    %277 = vmatpush2.bf16.msra.mxu0 0
    %278 = vmatprep.mubr.bf16.mxu0 0
    %279 = vmatmul.mubr.bf16.gmra.mxu0 %v244
    %v280 = vpop.f32.mrf.mxu0
    %v281 = vadd.f32 %v230, %v280
    %v282 = vpop.f32.mrf.mxu0
    %v283 = vpop.f32.mrf.mxu0
    %v284 = vpop.f32.mrf.mxu0
    %285 = vdwg.mxu0
    %v286 = vmul.f32 %v281, 0.2
    %v287 = vmax.f32 %v281, %v286
    %v288 = vpack.c.bf16 %v287, %v287
    %s289 = scalar_lea.vmem [#allocation5], 48
    %v290 = vld [vmem:[%s289] sm:$0xf]
    %v291 = vld [vmem:[%s289 + $0x4] sm:$0xf]
    %v292 = vld [vmem:[%s289 + $0x8] sm:$0xf]
    %v293 = vld [vmem:[%s289 + $0xc] sm:$0xf]
    %v294 = vld [vmem:[#allocation7 + $0x3] sm:$0x1]
    %v295 = vlaneseq
    %v296 = vshrl.u32 %v295, 7
    %v297 = vsub.s32 0, %v296
    %v298 = vrot.slane %v294, %v297
    %v303 = vunpack.c.l.b16 %v290
    %v304 = vunpack.c.l.b16 %v291
    %v305 = vunpack.c.l.b16 %v292
    %v306 = vunpack.c.l.b16 %v293
    %v307 = vpack.c.b16 %v304, %v303
    %v308 = vpack.c.b16 %v306, %v305
    %v312 = vsel %vm106, %v288, 0
    %314 = vmatprep.subr.bf16.mxu0 0
    %315 = vmatpush1.bf16.msra.mxu0 0
    %316 = vmatprep.subr.bf16.mxu0 0
    %317 = vmatpush1.bf16.msra.mxu0 0
    %318 = vmatprep.subr.bf16.mxu0 0
    %319 = vmatpush1.bf16.msra.mxu0 0
    %320 = vmatprep.subr.bf16.mxu0 0
    %321 = vmatpush1.bf16.msra.mxu0 0
    %322 = vmatprep.subr.bf16.mxu0 0
    %323 = vmatpush1.bf16.msra.mxu0 0
    %324 = vmatprep.subr.bf16.mxu0 0
    %325 = vmatpush1.bf16.msra.mxu0 0
    %326 = vmatprep.subr.bf16.mxu0 0
    %327 = vmatpush1.bf16.msra.mxu0 %v308
    %328 = vmatprep.subr.bf16.mxu0 0
    %329 = vmatpush1.bf16.msra.mxu0 %v307
    %330 = vmatprep.subr.bf16.mxu0 0
    %331 = vmatpush2.bf16.msra.mxu0 0
    %332 = vmatprep.subr.bf16.mxu0 0
    %333 = vmatpush2.bf16.msra.mxu0 0
    %334 = vmatprep.subr.bf16.mxu0 0
    %335 = vmatpush2.bf16.msra.mxu0 0
    %336 = vmatprep.subr.bf16.mxu0 0
    %337 = vmatpush2.bf16.msra.mxu0 0
    %338 = vmatprep.subr.bf16.mxu0 0
    %339 = vmatpush2.bf16.msra.mxu0 0
    %340 = vmatprep.subr.bf16.mxu0 0
    %341 = vmatpush2.bf16.msra.mxu0 0
    %342 = vmatprep.subr.bf16.mxu0 0
    %343 = vmatpush2.bf16.msra.mxu0 0
    %344 = vmatprep.subr.bf16.mxu0 0
    %345 = vmatpush2.bf16.msra.mxu0 0
    %346 = vmatprep.mubr.bf16.mxu0 0
    %347 = vmatmul.mubr.bf16.gmra.mxu0 %v312
    %v348 = vpop.f32.mrf.mxu0
    %v349 = vadd.f32 %v298, %v348
    %v350 = vpop.f32.mrf.mxu0
    %v351 = vpop.f32.mrf.mxu0
    %v352 = vpop.f32.mrf.mxu0
    %353 = vdwg.mxu0
    %v354 = vmul.f32 %v349, 0.2
    %v355 = vmax.f32 %v349, %v354
    %v356 = vpack.c.bf16 %v355, %v355
    %s357 = scalar_lea.vmem [#allocation5], 64
    %v358 = vld [vmem:[%s357] sm:$0xf]
    %v359 = vld [vmem:[%s357 + $0x4] sm:$0xf]
    %v360 = vld [vmem:[%s357 + $0x8] sm:$0xf]
    %v361 = vld [vmem:[%s357 + $0xc] sm:$0xf]
    %v362 = vld [vmem:[#allocation7 + $0x4] sm:$0x1]
    %v363 = vlaneseq
    %v364 = vshrl.u32 %v363, 7
    %v365 = vsub.s32 0, %v364
    %v366 = vrot.slane %v362, %v365
    %v371 = vunpack.c.l.b16 %v358
    %v372 = vunpack.c.l.b16 %v359
    %v373 = vunpack.c.l.b16 %v360
    %v374 = vunpack.c.l.b16 %v361
    %v375 = vpack.c.b16 %v372, %v371
    %v376 = vpack.c.b16 %v374, %v373
    %v380 = vsel %vm106, %v356, 0
    %382 = vmatprep.subr.bf16.mxu0 0
    %383 = vmatpush1.bf16.msra.mxu0 0
    %384 = vmatprep.subr.bf16.mxu0 0
    %385 = vmatpush1.bf16.msra.mxu0 0
    %386 = vmatprep.subr.bf16.mxu0 0
    %387 = vmatpush1.bf16.msra.mxu0 0
    %388 = vmatprep.subr.bf16.mxu0 0
    %389 = vmatpush1.bf16.msra.mxu0 0
    %390 = vmatprep.subr.bf16.mxu0 0
    %391 = vmatpush1.bf16.msra.mxu0 0
    %392 = vmatprep.subr.bf16.mxu0 0
    %393 = vmatpush1.bf16.msra.mxu0 0
    %394 = vmatprep.subr.bf16.mxu0 0
    %395 = vmatpush1.bf16.msra.mxu0 %v376
    %396 = vmatprep.subr.bf16.mxu0 0
    %397 = vmatpush1.bf16.msra.mxu0 %v375
    %398 = vmatprep.subr.bf16.mxu0 0
    %399 = vmatpush2.bf16.msra.mxu0 0
    %400 = vmatprep.subr.bf16.mxu0 0
    %401 = vmatpush2.bf16.msra.mxu0 0
    %402 = vmatprep.subr.bf16.mxu0 0
    %403 = vmatpush2.bf16.msra.mxu0 0
    %404 = vmatprep.subr.bf16.mxu0 0
    %405 = vmatpush2.bf16.msra.mxu0 0
    %406 = vmatprep.subr.bf16.mxu0 0
    %407 = vmatpush2.bf16.msra.mxu0 0
    %408 = vmatprep.subr.bf16.mxu0 0
    %409 = vmatpush2.bf16.msra.mxu0 0
    %410 = vmatprep.subr.bf16.mxu0 0
    %411 = vmatpush2.bf16.msra.mxu0 0
    %412 = vmatprep.subr.bf16.mxu0 0
    %413 = vmatpush2.bf16.msra.mxu0 0
    %414 = vmatprep.mubr.bf16.mxu0 0
    %415 = vmatmul.mubr.bf16.gmra.mxu0 %v380
    %v416 = vpop.f32.mrf.mxu0
    %v417 = vadd.f32 %v366, %v416
    %v418 = vpop.f32.mrf.mxu0
    %v419 = vpop.f32.mrf.mxu0
    %v420 = vpop.f32.mrf.mxu0
    %421 = vdwg.mxu0
    %v422 = vmul.f32 %v417, 0.2
    %v423 = vmax.f32 %v417, %v422
    %v424 = vpack.c.bf16 %v423, %v423
    %s425 = scalar_lea.vmem [#allocation5], 80
    %v426 = vld [vmem:[%s425] sm:$0xf]
    %v427 = vld [vmem:[%s425 + $0x4] sm:$0xf]
    %v428 = vld [vmem:[%s425 + $0x8] sm:$0xf]
    %v429 = vld [vmem:[%s425 + $0xc] sm:$0xf]
    %v430 = vld [vmem:[#allocation7 + $0x5] sm:$0x1]
    %v431 = vlaneseq
    %v432 = vshrl.u32 %v431, 7
    %v433 = vsub.s32 0, %v432
    %v434 = vrot.slane %v430, %v433
    %v439 = vunpack.c.l.b16 %v426
    %v440 = vunpack.c.l.b16 %v427
    %v441 = vunpack.c.l.b16 %v428
    %v442 = vunpack.c.l.b16 %v429
    %v443 = vpack.c.b16 %v440, %v439
    %v444 = vpack.c.b16 %v442, %v441
    %v448 = vsel %vm106, %v424, 0
    %450 = vmatprep.subr.bf16.mxu0 0
    %451 = vmatpush1.bf16.msra.mxu0 0
    %452 = vmatprep.subr.bf16.mxu0 0
    %453 = vmatpush1.bf16.msra.mxu0 0
    %454 = vmatprep.subr.bf16.mxu0 0
    %455 = vmatpush1.bf16.msra.mxu0 0
    %456 = vmatprep.subr.bf16.mxu0 0
    %457 = vmatpush1.bf16.msra.mxu0 0
    %458 = vmatprep.subr.bf16.mxu0 0
    %459 = vmatpush1.bf16.msra.mxu0 0
    %460 = vmatprep.subr.bf16.mxu0 0
    %461 = vmatpush1.bf16.msra.mxu0 0
    %462 = vmatprep.subr.bf16.mxu0 0
    %463 = vmatpush1.bf16.msra.mxu0 %v444
    %464 = vmatprep.subr.bf16.mxu0 0
    %465 = vmatpush1.bf16.msra.mxu0 %v443
    %466 = vmatprep.subr.bf16.mxu0 0
    %467 = vmatpush2.bf16.msra.mxu0 0
    %468 = vmatprep.subr.bf16.mxu0 0
    %469 = vmatpush2.bf16.msra.mxu0 0
    %470 = vmatprep.subr.bf16.mxu0 0
    %471 = vmatpush2.bf16.msra.mxu0 0
    %472 = vmatprep.subr.bf16.mxu0 0
    %473 = vmatpush2.bf16.msra.mxu0 0
    %474 = vmatprep.subr.bf16.mxu0 0
    %475 = vmatpush2.bf16.msra.mxu0 0
    %476 = vmatprep.subr.bf16.mxu0 0
    %477 = vmatpush2.bf16.msra.mxu0 0
    %478 = vmatprep.subr.bf16.mxu0 0
    %479 = vmatpush2.bf16.msra.mxu0 0
    %480 = vmatprep.subr.bf16.mxu0 0
    %481 = vmatpush2.bf16.msra.mxu0 0
    %482 = vmatprep.mubr.bf16.mxu0 0
    %483 = vmatmul.mubr.bf16.gmra.mxu0 %v448
    %v484 = vpop.f32.mrf.mxu0
    %v485 = vadd.f32 %v434, %v484
    %v486 = vpop.f32.mrf.mxu0
    %v487 = vpop.f32.mrf.mxu0
    %v488 = vpop.f32.mrf.mxu0
    %489 = vdwg.mxu0
    %v490 = vmul.f32 %v485, 0.2
    %v491 = vmax.f32 %v485, %v490
    %v492 = vpack.c.bf16 %v491, %v491
    %s493 = scalar_lea.vmem [#allocation5], 96
    %v494 = vld [vmem:[%s493] sm:$0xf]
    %v495 = vld [vmem:[%s493 + $0x4] sm:$0xf]
    %v496 = vld [vmem:[%s493 + $0x8] sm:$0xf]
    %v497 = vld [vmem:[%s493 + $0xc] sm:$0xf]
    %v498 = vld [vmem:[#allocation7 + $0x6] sm:$0x1]
    %v499 = vlaneseq
    %v500 = vshrl.u32 %v499, 7
    %v501 = vsub.s32 0, %v500
    %v502 = vrot.slane %v498, %v501
    %v507 = vunpack.c.l.b16 %v494
    %v508 = vunpack.c.l.b16 %v495
    %v509 = vunpack.c.l.b16 %v496
    %v510 = vunpack.c.l.b16 %v497
    %v511 = vpack.c.b16 %v508, %v507
    %v512 = vpack.c.b16 %v510, %v509
    %v516 = vsel %vm106, %v492, 0
    %518 = vmatprep.subr.bf16.mxu0 0
    %519 = vmatpush1.bf16.msra.mxu0 0
    %520 = vmatprep.subr.bf16.mxu0 0
    %521 = vmatpush1.bf16.msra.mxu0 0
    %522 = vmatprep.subr.bf16.mxu0 0
    %523 = vmatpush1.bf16.msra.mxu0 0
    %524 = vmatprep.subr.bf16.mxu0 0
    %525 = vmatpush1.bf16.msra.mxu0 0
    %526 = vmatprep.subr.bf16.mxu0 0
    %527 = vmatpush1.bf16.msra.mxu0 0
    %528 = vmatprep.subr.bf16.mxu0 0
    %529 = vmatpush1.bf16.msra.mxu0 0
    %530 = vmatprep.subr.bf16.mxu0 0
    %531 = vmatpush1.bf16.msra.mxu0 %v512
    %532 = vmatprep.subr.bf16.mxu0 0
    %533 = vmatpush1.bf16.msra.mxu0 %v511
    %534 = vmatprep.subr.bf16.mxu0 0
    %535 = vmatpush2.bf16.msra.mxu0 0
    %536 = vmatprep.subr.bf16.mxu0 0
    %537 = vmatpush2.bf16.msra.mxu0 0
    %538 = vmatprep.subr.bf16.mxu0 0
    %539 = vmatpush2.bf16.msra.mxu0 0
    %540 = vmatprep.subr.bf16.mxu0 0
    %541 = vmatpush2.bf16.msra.mxu0 0
    %542 = vmatprep.subr.bf16.mxu0 0
    %543 = vmatpush2.bf16.msra.mxu0 0
    %544 = vmatprep.subr.bf16.mxu0 0
    %545 = vmatpush2.bf16.msra.mxu0 0
    %546 = vmatprep.subr.bf16.mxu0 0
    %547 = vmatpush2.bf16.msra.mxu0 0
    %548 = vmatprep.subr.bf16.mxu0 0
    %549 = vmatpush2.bf16.msra.mxu0 0
    %550 = vmatprep.mubr.bf16.mxu0 0
    %551 = vmatmul.mubr.bf16.gmra.mxu0 %v516
    %v552 = vpop.f32.mrf.mxu0
    %v553 = vadd.f32 %v502, %v552
    %v554 = vpop.f32.mrf.mxu0
    %v555 = vpop.f32.mrf.mxu0
    %v556 = vpop.f32.mrf.mxu0
    %557 = vdwg.mxu0
    %v558 = vmul.f32 %v553, 0.2
    %v559 = vmax.f32 %v553, %v558
    %v560 = vpack.c.bf16 %v559, %v559
    %v561 = vld [vmem:[#allocation8] sm:$0xf]
    %v562 = vld [vmem:[#allocation8 + $0x4] sm:$0xf]
    %v563 = vld [vmem:[#allocation8 + $0x8] sm:$0xf]
    %v564 = vld [vmem:[#allocation8 + $0xc] sm:$0xf]
    %v565 = vld [vmem:[%s4] sm:$0x1]
    %v567 = vlaneseq
    %v568 = vshrl.u32 %v567, 7
    %v569 = vsub.s32 0, %v568
    %v570 = vrot.slane %v565, %v569
    %v576 = vunpack.c.l.b16 %v561
    %v577 = vunpack.c.l.b16 %v562
    %v578 = vunpack.c.l.b16 %v563
    %v579 = vunpack.c.l.b16 %v564
    %v580 = vpack.c.b16 %v577, %v576
    %v581 = vpack.c.b16 %v579, %v578
    %v585 = vsel %vm106, %v560, 0
    %587 = vmatprep.subr.bf16.mxu0 0
    %588 = vmatpush1.bf16.msra.mxu0 0
    %589 = vmatprep.subr.bf16.mxu0 0
    %590 = vmatpush1.bf16.msra.mxu0 0
    %591 = vmatprep.subr.bf16.mxu0 0
    %592 = vmatpush1.bf16.msra.mxu0 0
    %593 = vmatprep.subr.bf16.mxu0 0
    %594 = vmatpush1.bf16.msra.mxu0 0
    %595 = vmatprep.subr.bf16.mxu0 0
    %596 = vmatpush1.bf16.msra.mxu0 0
    %597 = vmatprep.subr.bf16.mxu0 0
    %598 = vmatpush1.bf16.msra.mxu0 0
    %599 = vmatprep.subr.bf16.mxu0 0
    %600 = vmatpush1.bf16.msra.mxu0 %v581
    %601 = vmatprep.subr.bf16.mxu0 0
    %602 = vmatpush1.bf16.msra.mxu0 %v580
    %603 = vmatprep.subr.bf16.mxu0 0
    %604 = vmatpush2.bf16.msra.mxu0 0
    %605 = vmatprep.subr.bf16.mxu0 0
    %606 = vmatpush2.bf16.msra.mxu0 0
    %607 = vmatprep.subr.bf16.mxu0 0
    %608 = vmatpush2.bf16.msra.mxu0 0
    %609 = vmatprep.subr.bf16.mxu0 0
    %610 = vmatpush2.bf16.msra.mxu0 0
    %611 = vmatprep.subr.bf16.mxu0 0
    %612 = vmatpush2.bf16.msra.mxu0 0
    %613 = vmatprep.subr.bf16.mxu0 0
    %614 = vmatpush2.bf16.msra.mxu0 0
    %615 = vmatprep.subr.bf16.mxu0 0
    %616 = vmatpush2.bf16.msra.mxu0 0
    %617 = vmatprep.subr.bf16.mxu0 0
    %618 = vmatpush2.bf16.msra.mxu0 0
    %619 = vmatprep.mubr.bf16.mxu0 0
    %620 = vmatmul.mubr.bf16.gmra.mxu0 %v585
    %v621 = vpop.f32.mrf.mxu0
    %v622 = vadd.f32 %v570, %v621
    %v623 = vpop.f32.mrf.mxu0
    %v624 = vpop.f32.mrf.mxu0
    %v625 = vpop.f32.mrf.mxu0
    %626 = vdwg.mxu0
    %v627 = vmul.f32 %v622, 0.2
    %v628 = vmax.f32 %v622, %v627
    %629 = vst.msk [vmem:[#allocation10] sm:$0x3] %vm75, %v628
    // Predicated region
    $region38: #{tpu_custom_call.1} parent=1 // pred_check
      _
    $region39: #{tpu_custom_call.1} parent=1 // pred_check_branch
      %631 = sbr.rel (0) target = $region41
    $region40: #{tpu_custom_call.1} parent=1 // pred_region
      %s633 = ssub.s32 32, 32
      %634 = vsyncadd [#allocation4], %s633
      %s636 = sshll.u32 [#allocation10], 4
      %s637 = int_to_ptr.vmem [resolvable:$true] %s636
      %639 = dma.vmem_to_hbm [thread:$0]  %s637, 32, %s5, [#allocation4]
    $region41: #{tpu_custom_call.1} parent=1 // pred_fallthru
      _
    // Predicated region
    $region42: #{tpu_custom_call.1} parent=1 // pred_check
      _
    $region43: #{tpu_custom_call.1} parent=1 // pred_check_branch
      %641 = sbr.rel (0) target = $region45
    $region44: #{tpu_custom_call.1} parent=1 // pred_region
      %642 = dma.done [#allocation4], 32
    $region45: #{tpu_custom_call.1} parent=1 // pred_fallthru
      _
    %643 = vsyncpa [#allocation3], 1
    %644 = vsyncpa [#allocation6], 1
    %645 = vsyncpa [#allocation9], 1
    %646 = vsyncpa [#allocation4], 1

</llo_original>
